<compile_context>
chip_gen: v5e
topology: v5e:2x2
jax: 0.10.0
libtpu: 0.0.40
codegen_flags: <defaults>
</compile_context>

<pallas_src>
import jax
import jax.numpy as jnp
from jax.experimental import pallas as pl
from jax.experimental.pallas import tpu as pltpu  # noqa: F401  (TPU backend)

# ---------------- config (small, deterministic) ----------------
CONFIG = dict(latent_dim=32, channels=4, image_size=16)
IMG_SHAPE = (CONFIG["channels"], CONFIG["image_size"], CONFIG["image_size"])
IMG_FLAT = IMG_SHAPE[0] * IMG_SHAPE[1] * IMG_SHAPE[2]   # 4*16*16 = 1024
HIDDEN = 512
BN_EPS = 1e-5
LRELU_SLOPE = 0.2

# Offsets into the packed small-vector input (single DMA; all offsets are
# multiples of 128 lanes so in-kernel static slices stay aligned).
_OFF_B1 = 0
_OFF_B2 = _OFF_B1 + HIDDEN
_OFF_GAMMA = _OFF_B2 + HIDDEN
_OFF_BETA = _OFF_GAMMA + HIDDEN
_OFF_S2 = _OFF_BETA + HIDDEN
_OFF_B3 = _OFF_S2 + HIDDEN
_OFF_S3 = _OFF_B3 + IMG_FLAT
VEC_LEN = _OFF_S3 + IMG_FLAT            # 4608


def _leaky_relu(x):
    # LeakyReLU(0.2) == max(x, 0.2*x) for slope in (0, 1): 2 VPU ops, no select.
    return jnp.maximum(x, LRELU_SLOPE * x)


def _weights_as_bf16(w_ref):
    w = w_ref[...]
    if w.dtype == jnp.bfloat16:
        return w
    # int8 -> f32 -> bf16; int8 magnitudes (<=127) are exact in bf16, so the
    # only approximation vs. the dequantized weight is the per-column scale,
    # which is applied (exactly, in f32) on the matmul result instead.
    return w.astype(jnp.float32).astype(jnp.bfloat16)


def decoder_kernel(z_ref, w1_ref, w2_ref, w3_ref, vec_ref, out_ref):
    # Unpack the fused small-vector input (static, aligned lane slices).
    b1 = vec_ref[:, _OFF_B1:_OFF_B1 + HIDDEN]
    b2 = vec_ref[:, _OFF_B2:_OFF_B2 + HIDDEN]
    gamma = vec_ref[:, _OFF_GAMMA:_OFF_GAMMA + HIDDEN]
    beta = vec_ref[:, _OFF_BETA:_OFF_BETA + HIDDEN]
    s2 = vec_ref[:, _OFF_S2:_OFF_S2 + HIDDEN]
    b3 = vec_ref[:, _OFF_B3:_OFF_B3 + IMG_FLAT]
    s3 = vec_ref[:, _OFF_S3:_OFF_S3 + IMG_FLAT]

    # Layer 1: Linear(latent_dim -> 512) + LeakyReLU(0.2).  bf16 MXU, f32 acc.
    h1 = jnp.dot(z_ref[...].astype(jnp.bfloat16), w1_ref[...],
                 preferred_element_type=jnp.float32)
    h1 = _leaky_relu(h1 + b1)

    # Layer 2: Linear(512 -> 512).  Per-output-channel dequant scale (ones in
    # the bf16 path) applied on the small (B, 512) result, then bias.
    h2 = jnp.dot(h1.astype(jnp.bfloat16), _weights_as_bf16(w2_ref),
                 preferred_element_type=jnp.float32)
    h2 = h2 * s2 + b2

    # BatchNorm1d(512), training-mode semantics: per-feature batch mean and
    # biased variance over the batch axis, eps=1e-5, affine gamma/beta.
    # Fused form: one scale-mul + one shift-add per element.
    mean = jnp.mean(h2, axis=0, keepdims=True)                   # (1, 512)
    var = jnp.mean(jnp.square(h2 - mean), axis=0, keepdims=True)
    inv = jax.lax.rsqrt(var + BN_EPS)                            # EUP
    scale = gamma * inv
    shift = beta - mean * scale
    h2n = _leaky_relu(h2 * scale + shift)

    # Layer 3: Linear(512 -> C*H*W) + Tanh.
    h3 = jnp.dot(h2n.astype(jnp.bfloat16), _weights_as_bf16(w3_ref),
                 preferred_element_type=jnp.float32)
    out_ref[...] = jnp.tanh(h3 * s3 + b3)


def decoder_forward(z, params):
    """z: (B, latent_dim) f32 -> img: (B, C, H, W) f32."""
    B = z.shape[0]
    L = CONFIG["latent_dim"]
    w1, w2, w3, vec = params

    def full(a):
        shape = a.shape
        return pl.BlockSpec(shape, lambda: (0,) * len(shape))

    # Advisory cost hint so XLA schedules surrounding ops sensibly.
    matmul_flops = 2 * B * (L * HIDDEN + HIDDEN * HIDDEN + HIDDEN * IMG_FLAT)
    bytes_accessed = (
        z.size * z.dtype.itemsize
        + sum(int(a.size) * a.dtype.itemsize for a in params)
        + B * IMG_FLAT * 4
    )
    cost = pl.CostEstimate(
        flops=int(matmul_flops),
        transcendentals=int(B * IMG_FLAT + HIDDEN),   # tanh + rsqrt
        bytes_accessed=int(bytes_accessed),
    )

    flat = pl.pallas_call(
        decoder_kernel,
        out_shape=jax.ShapeDtypeStruct((B, IMG_FLAT), jnp.float32),
        grid=(),
        in_specs=[full(z), full(w1), full(w2), full(w3), full(vec)],
        out_specs=pl.BlockSpec((B, IMG_FLAT), lambda: (0, 0)),
        cost_estimate=cost,
    )(z, w1, w2, w3, vec)

    # Glue: reshape flat output to NCHW image layout.
    return flat.reshape(B, *IMG_SHAPE)


# ---------------- parameter construction ----------------
def _int8_weights_supported():
    """int8 weight storage on v5e/v6e (native-int MXU generations with the
    slowest HBM => biggest DMA win); bf16 on v7x (no int MXU) / unknown."""
    try:
        kind = jax.devices()[0].device_kind.lower()
    except Exception:
        return False
    return ("v5" in kind) or ("v6" in kind)


def _quantize_per_col_int8(w):
    amax = jnp.max(jnp.abs(w), axis=0, keepdims=True)          # (1, N)
    scale = jnp.maximum(amax, 1e-8) / 127.0
    wq = jnp.clip(jnp.round(w / scale), -127.0, 127.0).astype(jnp.int8)
    return wq, scale.astype(jnp.float32)


def init_params(key, use_int8):
    """Deterministic synthetic parameters (shapes match the torch module).

    Returns (kernel_params, ref_params). Kernel weights are [in, out]
    (transposed vs. torch nn.Linear.weight); w2/w3 are int8+scale or bf16
    depending on `use_int8`; the small f32 vectors are packed into one array.
    """
    L = CONFIG["latent_dim"]
    ks = jax.random.split(key, 6)
    w1f = jax.random.normal(ks[0], (L, HIDDEN), jnp.float32) / jnp.sqrt(L)
    b1 = jax.random.normal(ks[1], (1, HIDDEN), jnp.float32) * 0.01
    w2f = jax.random.normal(ks[2], (HIDDEN, HIDDEN), jnp.float32) / jnp.sqrt(HIDDEN)
    b2 = jax.random.normal(ks[3], (1, HIDDEN), jnp.float32) * 0.01
    w3f = jax.random.normal(ks[4], (HIDDEN, IMG_FLAT), jnp.float32) / jnp.sqrt(HIDDEN)
    b3 = jax.random.normal(ks[5], (1, IMG_FLAT), jnp.float32) * 0.01
    gamma = jnp.ones((1, HIDDEN), jnp.float32)    # BatchNorm1d default weight
    beta = jnp.zeros((1, HIDDEN), jnp.float32)    # BatchNorm1d default bias

    w1 = w1f.astype(jnp.bfloat16)
    if use_int8:
        w2, s2 = _quantize_per_col_int8(w2f)
        w3, s3 = _quantize_per_col_int8(w3f)
    else:
        w2, s2 = w2f.astype(jnp.bfloat16), jnp.ones((1, HIDDEN), jnp.float32)
        w3, s3 = w3f.astype(jnp.bfloat16), jnp.ones((1, IMG_FLAT), jnp.float32)

    vec = jnp.concatenate([b1, b2, gamma, beta, s2, b3, s3], axis=1)
    assert vec.shape == (1, VEC_LEN)
    params = (w1, w2, w3, vec)

    # Reference weights exactly as the kernel sees them (dequantized, f32) so
    # the in-script check isolates kernel math from the quantization choice.
    ref = dict(
        w1=w1.astype(jnp.float32),
        w2=w2.astype(jnp.float32) * s2,
        w3=w3.astype(jnp.float32) * s3,
        b1=b1, b2=b2, b3=b3, gamma=gamma, beta=beta,
    )
    return params, ref


def decoder_reference(z, ref):
    """Pure-JAX f32 forward with the torch Decoder's training-mode semantics."""
    h1 = z @ ref["w1"] + ref["b1"]
    h1 = jnp.where(h1 > 0, h1, LRELU_SLOPE * h1)
    h2 = h1 @ ref["w2"] + ref["b2"]
    mean = jnp.mean(h2, axis=0, keepdims=True)
    var = jnp.mean(jnp.square(h2 - mean), axis=0, keepdims=True)
    h2n = (h2 - mean) * jax.lax.rsqrt(var + BN_EPS) * ref["gamma"] + ref["beta"]
    h2n = jnp.where(h2n > 0, h2n, LRELU_SLOPE * h2n)
    h3 = h2n @ ref["w3"] + ref["b3"]
    return jnp.tanh(h3).reshape(z.shape[0], *IMG_SHAPE)


if __name__ == "__main__":
    key = jax.random.PRNGKey(0)
    pkey, zkey = jax.random.split(key)

    use_int8 = _int8_weights_supported()
    params, ref = init_params(pkey, use_int8)

    # Small batch, but >=8: fills the 8 sublanes, amortizes the per-call
    # weight DMA a little, and keeps BatchNorm batch statistics well
    # conditioned (B=2 batch variance can be ~0).
    B = 8
    z = jax.random.normal(zkey, (B, CONFIG["latent_dim"]), jnp.float32)

    img = decoder_forward(z, params)
    jax.block_until_ready(img)

    assert img.shape == (B, *IMG_SHAPE), img.shape
    assert img.dtype == jnp.float32
    assert bool(jnp.all(jnp.isfinite(img)))
    assert bool(jnp.all(jnp.abs(img) <= 1.0))   # Tanh output must be bounded.

    # Numerics check vs. a pure-JAX f32 reference using the same (dequantized)
    # weights; remaining deviation is only the in-kernel bf16 activation casts.
    expected = decoder_reference(z, ref)
    max_err = float(jnp.max(jnp.abs(img - expected)))
    assert max_err < 0.15, f"max abs error vs f32 reference: {max_err}"

    print("KERNEL_OK")
</pallas_src>

<mosaic_0001>
module attributes {stable_mosaic.version = 11 : i64} {
  func.func @decoder_kernel(%arg0: memref<8x32xf32, #tpu.memory_space<vmem>>, %arg1: memref<32x512xbf16, #tpu.memory_space<vmem>>, %arg2: memref<512x512xbf16, #tpu.memory_space<vmem>>, %arg3: memref<512x1024xbf16, #tpu.memory_space<vmem>>, %arg4: memref<1x4608xf32, #tpu.memory_space<vmem>>, %arg5: memref<8x1024xf32, #tpu.memory_space<vmem>>) attributes {dimension_semantics = [], scalar_prefetch = 0 : i64, scratch_operands = 0 : i64, tpu.core_type = #tpu.core_type<tc>} {
    %c0 = arith.constant 0 : index
    %c0_0 = arith.constant 0 : index
    %0 = vector.load %arg4[%c0, %c0_0] : memref<1x4608xf32, #tpu.memory_space<vmem>>, vector<1x512xf32>
    %c0_1 = arith.constant 0 : index
    %c512 = arith.constant 512 : index
    %1 = vector.load %arg4[%c0_1, %c512] : memref<1x4608xf32, #tpu.memory_space<vmem>>, vector<1x512xf32>
    %c0_2 = arith.constant 0 : index
    %c1024 = arith.constant 1024 : index
    %2 = vector.load %arg4[%c0_2, %c1024] : memref<1x4608xf32, #tpu.memory_space<vmem>>, vector<1x512xf32>
    %c0_3 = arith.constant 0 : index
    %c1536 = arith.constant 1536 : index
    %3 = vector.load %arg4[%c0_3, %c1536] : memref<1x4608xf32, #tpu.memory_space<vmem>>, vector<1x512xf32>
    %c0_4 = arith.constant 0 : index
    %c2048 = arith.constant 2048 : index
    %4 = vector.load %arg4[%c0_4, %c2048] : memref<1x4608xf32, #tpu.memory_space<vmem>>, vector<1x512xf32>
    %c0_5 = arith.constant 0 : index
    %c2560 = arith.constant 2560 : index
    %5 = vector.load %arg4[%c0_5, %c2560] : memref<1x4608xf32, #tpu.memory_space<vmem>>, vector<1x1024xf32>
    %c0_6 = arith.constant 0 : index
    %c3584 = arith.constant 3584 : index
    %6 = vector.load %arg4[%c0_6, %c3584] : memref<1x4608xf32, #tpu.memory_space<vmem>>, vector<1x1024xf32>
    %c0_7 = arith.constant 0 : index
    %c0_8 = arith.constant 0 : index
    %7 = vector.load %arg0[%c0_7, %c0_8] : memref<8x32xf32, #tpu.memory_space<vmem>>, vector<8x32xf32>
    %8 = arith.truncf %7 : vector<8x32xf32> to vector<8x32xbf16>
    %c0_9 = arith.constant 0 : index
    %c0_10 = arith.constant 0 : index
    %9 = vector.load %arg1[%c0_9, %c0_10] : memref<32x512xbf16, #tpu.memory_space<vmem>>, vector<32x512xbf16>
    %cst = arith.constant dense<0.000000e+00> : vector<8x512xf32>
    %10 = tpu.matmul %8, %9, %cst {dimension_numbers = #tpu.dot_dimension_numbers<[1], [0], [0], [1], [0, 0, 1, 1], [], []>} : vector<8x32xbf16>, vector<32x512xbf16>, vector<8x512xf32> -> vector<8x512xf32>
    %11 = vector.broadcast %0 : vector<1x512xf32> to vector<8x512xf32>
    %12 = arith.addf %10, %11 : vector<8x512xf32>
    %cst_11 = arith.constant 2.000000e-01 : f32
    %13 = vector.broadcast %cst_11 : f32 to vector<8x512xf32>
    %14 = arith.mulf %13, %12 : vector<8x512xf32>
    %15 = arith.maximumf %12, %14 : vector<8x512xf32>
    %16 = arith.truncf %15 : vector<8x512xf32> to vector<8x512xbf16>
    %c0_12 = arith.constant 0 : index
    %c0_13 = arith.constant 0 : index
    %17 = vector.load %arg2[%c0_12, %c0_13] : memref<512x512xbf16, #tpu.memory_space<vmem>>, vector<512x512xbf16>
    %cst_14 = arith.constant dense<0.000000e+00> : vector<8x512xf32>
    %18 = tpu.matmul %16, %17, %cst_14 {dimension_numbers = #tpu.dot_dimension_numbers<[1], [0], [0], [1], [0, 0, 1, 1], [], []>} : vector<8x512xbf16>, vector<512x512xbf16>, vector<8x512xf32> -> vector<8x512xf32>
    %19 = vector.broadcast %4 : vector<1x512xf32> to vector<8x512xf32>
    %20 = arith.mulf %18, %19 : vector<8x512xf32>
    %21 = vector.broadcast %1 : vector<1x512xf32> to vector<8x512xf32>
    %22 = arith.addf %20, %21 : vector<8x512xf32>
    %cst_15 = arith.constant dense<0.000000e+00> : vector<512xf32>
    %23 = vector.multi_reduction <add>, %22, %cst_15 [0] : vector<8x512xf32> to vector<512xf32>
    %24 = vector.shape_cast %23 : vector<512xf32> to vector<1x512xf32>
    %cst_16 = arith.constant 8.000000e+00 : f32
    %25 = vector.broadcast %cst_16 : f32 to vector<1x512xf32>
    %26 = arith.divf %24, %25 : vector<1x512xf32>
    %27 = vector.broadcast %26 : vector<1x512xf32> to vector<8x512xf32>
    %28 = arith.subf %22, %27 : vector<8x512xf32>
    %29 = arith.mulf %28, %28 : vector<8x512xf32>
    %cst_17 = arith.constant dense<0.000000e+00> : vector<512xf32>
    %30 = vector.multi_reduction <add>, %29, %cst_17 [0] : vector<8x512xf32> to vector<512xf32>
    %31 = vector.shape_cast %30 : vector<512xf32> to vector<1x512xf32>
    %cst_18 = arith.constant 8.000000e+00 : f32
    %32 = vector.broadcast %cst_18 : f32 to vector<1x512xf32>
    %33 = arith.divf %31, %32 : vector<1x512xf32>
    %cst_19 = arith.constant 9.99999974E-6 : f32
    %34 = vector.broadcast %cst_19 : f32 to vector<1x512xf32>
    %35 = arith.addf %33, %34 : vector<1x512xf32>
    %36 = math.rsqrt %35 : vector<1x512xf32>
    %37 = arith.mulf %2, %36 : vector<1x512xf32>
    %38 = arith.mulf %26, %37 : vector<1x512xf32>
    %39 = arith.subf %3, %38 : vector<1x512xf32>
    %40 = vector.broadcast %37 : vector<1x512xf32> to vector<8x512xf32>
    %41 = arith.mulf %22, %40 : vector<8x512xf32>
    %42 = vector.broadcast %39 : vector<1x512xf32> to vector<8x512xf32>
    %43 = arith.addf %41, %42 : vector<8x512xf32>
    %cst_20 = arith.constant 2.000000e-01 : f32
    %44 = vector.broadcast %cst_20 : f32 to vector<8x512xf32>
    %45 = arith.mulf %44, %43 : vector<8x512xf32>
    %46 = arith.maximumf %43, %45 : vector<8x512xf32>
    %47 = arith.truncf %46 : vector<8x512xf32> to vector<8x512xbf16>
    %c0_21 = arith.constant 0 : index
    %c0_22 = arith.constant 0 : index
    %48 = vector.load %arg3[%c0_21, %c0_22] : memref<512x1024xbf16, #tpu.memory_space<vmem>>, vector<512x1024xbf16>
    %cst_23 = arith.constant dense<0.000000e+00> : vector<8x1024xf32>
    %49 = tpu.matmul %47, %48, %cst_23 {dimension_numbers = #tpu.dot_dimension_numbers<[1], [0], [0], [1], [0, 0, 1, 1], [], []>} : vector<8x512xbf16>, vector<512x1024xbf16>, vector<8x1024xf32> -> vector<8x1024xf32>
    %50 = vector.broadcast %6 : vector<1x1024xf32> to vector<8x1024xf32>
    %51 = arith.mulf %49, %50 : vector<8x1024xf32>
    %52 = vector.broadcast %5 : vector<1x1024xf32> to vector<8x1024xf32>
    %53 = arith.addf %51, %52 : vector<8x1024xf32>
    %54 = math.tanh %53 : vector<8x1024xf32>
    %c0_24 = arith.constant 0 : index
    %c0_25 = arith.constant 0 : index
    %55 = vector.load %arg5[%c0_24, %c0_25] : memref<8x1024xf32, #tpu.memory_space<vmem>>, vector<8x1024xf32>
    tpu.vector_store %arg5[%c0_24, %c0_25], %54 {strides = array<i32>} : memref<8x1024xf32, #tpu.memory_space<vmem>>, vector<8x1024xf32>,
    return
  }
}

</mosaic_0001>

<llo_original>
// kernel: tpu_custom_call.1
$region0: #{tpu_custom_call.1}
  #allocation0 [shape = 'u32[]', space=smem, size = 0x4, offset = 0x4, fixed_abs, tag = 'smem constant byte address 0x4 - core index']
  #allocation1 [shape = 'u32[72,128]{1,0:T(1,128)}', space=vmem, size = 0x9000, scoped, tag = 'internal scratch']
  %s0 = inlined_call_operand.hbm [shape: f32[8,32], index: 0, kind: input, shape index: {}]
  %s1 = inlined_call_operand.hbm [shape: bf16[32,512], index: 1, kind: input, shape index: {}]
  %s2 = inlined_call_operand.hbm [shape: bf16[512,512], index: 2, kind: input, shape index: {}]
  %s3 = inlined_call_operand.hbm [shape: bf16[512,1024], index: 3, kind: input, shape index: {}]
  %s4 = inlined_call_operand.hbm [shape: f32[1,4608], index: 4, kind: input, shape index: {}]
  %s5 = inlined_call_operand.hbm [shape: f32[8,1024], index: 5, kind: output, shape index: {}]
  %s6 = sld [smem:[#allocation0]]
  $region50: #{tpu_custom_call.1} parent=0
    _
  %s8 = ssub.s32 1, %s6
  %s9 = scalar_select 0, %s8, %s6
  $region1: #{tpu_custom_call.1} parent=0
    #allocation2 [shape = 'u8[4096]{0}', space=vmem, size = 0x1000, scoped, tag = 'input window, operand 0, single buffered']
    #allocation3 [shape = 's32[1]{0}', space=sflag, size = 0x4, scoped, tag = 'scoped memory for tpu_custom_call.1']
    #allocation4 [shape = 's32[1]{0}', space=sflag, size = 0x4, scoped, tag = 'scoped memory for tpu_custom_call.1']
    #allocation5 [shape = 'u8[32768]{0}', space=vmem, size = 0x8000, scoped, tag = 'input window, operand 1, single buffered']
    #allocation6 [shape = 's32[1]{0}', space=sflag, size = 0x4, scoped, tag = 'scoped memory for tpu_custom_call.1']
    #allocation7 [shape = 'u8[524288]{0}', space=vmem, size = 0x80000, scoped, tag = 'input window, operand 2, single buffered']
    #allocation8 [shape = 'u8[1048576]{0}', space=vmem, size = 0x100000, scoped, tag = 'input window, operand 3, single buffered']
    #allocation9 [shape = 's32[1]{0}', space=sflag, size = 0x4, scoped, tag = 'scoped memory for tpu_custom_call.1']
    #allocation10 [shape = 'u8[18432]{0}', space=vmem, size = 0x4800, scoped, tag = 'input window, operand 4, single buffered']
    #allocation11 [shape = 'u8[32768]{0}', space=vmem, size = 0x8000, scoped, tag = 'output window, operand 0, single buffered']
    %10 = vsyncpa [#allocation3], 0
    %11 = vsyncpa [#allocation6], 0
    %12 = vsyncpa [#allocation9], 0
    %13 = vsyncpa [#allocation4], 0
    // Predicated region
    $region2: #{tpu_custom_call.1} parent=1 // pred_check
      _
    $region3: #{tpu_custom_call.1} parent=1 // pred_check_branch
      %15 = sbr.rel (0) target = $region5
    $region4: #{tpu_custom_call.1} parent=1 // pred_region
      %17 = vsyncadd [#allocation3], 0
      %s19 = sshll.u32 %s0, 4
      %s20 = int_to_ptr.hbm [resolvable:$true] %s19
      %s21 = sshll.u32 [#allocation2], 4
      %s22 = int_to_ptr.vmem [resolvable:$true] %s21
      %24 = dma.hbm_to_vmem [thread:$0]  %s20, 128, %s22, [#allocation3]
    $region5: #{tpu_custom_call.1} parent=1 // pred_fallthru
      _
    // Predicated region
    $region6: #{tpu_custom_call.1} parent=1 // pred_check
      _
    $region7: #{tpu_custom_call.1} parent=1 // pred_check_branch
      %26 = sbr.rel (0) target = $region9
    $region8: #{tpu_custom_call.1} parent=1 // pred_region
      %28 = vsyncadd [#allocation6], 0
      %s29 = sshll.u32 %s1, 4
      %s30 = int_to_ptr.hbm [resolvable:$true] %s29
      %s31 = sshll.u32 [#allocation5], 4
      %s32 = int_to_ptr.vmem [resolvable:$true] %s31
      %37 = dma.hbm_to_vmem [thread:$0]  %s30, 1024, %s32, [#allocation6], 256, 256, 16
    $region9: #{tpu_custom_call.1} parent=1 // pred_fallthru
      _
    // Predicated region
    $region10: #{tpu_custom_call.1} parent=1 // pred_check
      _
    $region11: #{tpu_custom_call.1} parent=1 // pred_check_branch
      %39 = sbr.rel (0) target = $region13
    $region12: #{tpu_custom_call.1} parent=1 // pred_region
      %41 = vsyncadd [#allocation6], 0
      %s42 = sshll.u32 %s2, 4
      %s43 = int_to_ptr.hbm [resolvable:$true] %s42
      %s44 = sshll.u32 [#allocation7], 4
      %s45 = int_to_ptr.vmem [resolvable:$true] %s44
      %50 = dma.hbm_to_vmem [thread:$0]  %s43, 16384, %s45, [#allocation6], 256, 256, 16
    $region13: #{tpu_custom_call.1} parent=1 // pred_fallthru
      _
    // Predicated region
    $region14: #{tpu_custom_call.1} parent=1 // pred_check
      _
    $region15: #{tpu_custom_call.1} parent=1 // pred_check_branch
      %52 = sbr.rel (0) target = $region17
    $region16: #{tpu_custom_call.1} parent=1 // pred_region
      %54 = vsyncadd [#allocation9], 0
      %s55 = sshll.u32 %s3, 4
      %s56 = int_to_ptr.hbm [resolvable:$true] %s55
      %s57 = sshll.u32 [#allocation8], 4
      %s58 = int_to_ptr.vmem [resolvable:$true] %s57
      %63 = dma.hbm_to_vmem [thread:$0]  %s56, 32768, %s58, [#allocation9], 512, 512, 32
    $region17: #{tpu_custom_call.1} parent=1 // pred_fallthru
      _
    // Predicated region
    $region18: #{tpu_custom_call.1} parent=1 // pred_check
      _
    $region19: #{tpu_custom_call.1} parent=1 // pred_check_branch
      %65 = sbr.rel (0) target = $region21
    $region20: #{tpu_custom_call.1} parent=1 // pred_region
      %67 = vsyncadd [#allocation9], 0
      %s69 = sshll.u32 %s4, 4
      %s70 = int_to_ptr.hbm [resolvable:$true] %s69
      %s71 = sshll.u32 [#allocation10], 4
      %s72 = int_to_ptr.vmem [resolvable:$true] %s71
      %74 = dma.hbm_to_vmem [thread:$0]  %s70, 576, %s72, [#allocation9]
    $region21: #{tpu_custom_call.1} parent=1 // pred_fallthru
      _
    // Predicated region
    $region22: #{tpu_custom_call.1} parent=1 // pred_check
      _
    $region23: #{tpu_custom_call.1} parent=1 // pred_check_branch
      %76 = sbr.rel (0) target = $region25
    $region24: #{tpu_custom_call.1} parent=1 // pred_region
      %78 = dma.done [#allocation3], 128
    $region25: #{tpu_custom_call.1} parent=1 // pred_fallthru
      _
    // Predicated region
    $region26: #{tpu_custom_call.1} parent=1 // pred_check
      _
    $region27: #{tpu_custom_call.1} parent=1 // pred_check_branch
      %80 = sbr.rel (0) target = $region29
    $region28: #{tpu_custom_call.1} parent=1 // pred_region
      %82 = dma.done [#allocation6], 1024
    $region29: #{tpu_custom_call.1} parent=1 // pred_fallthru
      _
    // Predicated region
    $region30: #{tpu_custom_call.1} parent=1 // pred_check
      _
    $region31: #{tpu_custom_call.1} parent=1 // pred_check_branch
      %84 = sbr.rel (0) target = $region33
    $region32: #{tpu_custom_call.1} parent=1 // pred_region
      %86 = dma.done [#allocation6], 16384
    $region33: #{tpu_custom_call.1} parent=1 // pred_fallthru
      _
    // Predicated region
    $region34: #{tpu_custom_call.1} parent=1 // pred_check
      _
    $region35: #{tpu_custom_call.1} parent=1 // pred_check_branch
      %88 = sbr.rel (0) target = $region37
    $region36: #{tpu_custom_call.1} parent=1 // pred_region
      %90 = dma.done [#allocation9], 32768
    $region37: #{tpu_custom_call.1} parent=1 // pred_fallthru
      _
    // Predicated region
    $region38: #{tpu_custom_call.1} parent=1 // pred_check
      _
    $region39: #{tpu_custom_call.1} parent=1 // pred_check_branch
      %92 = sbr.rel (0) target = $region41
    $region40: #{tpu_custom_call.1} parent=1 // pred_region
      %94 = dma.done [#allocation9], 576
    $region41: #{tpu_custom_call.1} parent=1 // pred_fallthru
      _
    %v96 = vld [vmem:[#allocation10] sm:$0xf]
    %v97 = vld [vmem:[#allocation10 + $0x4] sm:$0xf]
    %v98 = vld [vmem:[#allocation10 + $0x8] sm:$0xf]
    %v99 = vld [vmem:[#allocation10 + $0xc] sm:$0xf]
    %v100 = vld [vmem:[#allocation10 + $0x10] sm:$0xf]
    %v101 = vld [vmem:[#allocation10 + $0x14] sm:$0xff]
    %v102 = vld [vmem:[#allocation10 + $0x1c] sm:$0xff]
    %v103 = vld [vmem:[#allocation2] sm:$0xff]
    %v104 = vpack.c.bf16 %v103, %v103
    %v105 = vld [vmem:[#allocation5] sm:$0xff]
    %v106 = vld [vmem:[#allocation5 + $0x8] sm:$0xff]
    %v107 = vld [vmem:[#allocation5 + $0x10] sm:$0xff]
    %v108 = vld [vmem:[#allocation5 + $0x18] sm:$0xff]
    %v109 = vld [vmem:[#allocation5 + $0x20] sm:$0xff]
    %v110 = vld [vmem:[#allocation5 + $0x28] sm:$0xff]
    %v111 = vld [vmem:[#allocation5 + $0x30] sm:$0xff]
    %v112 = vld [vmem:[#allocation5 + $0x38] sm:$0xff]
    %v114 = vperm.slane %v96, 0
    %v115 = vperm.slane %v96, 1
    %v116 = vperm.slane %v96, 2
    %v117 = vperm.slane %v96, 3
    %v130 = vunpack.c.l.b16 %v105
    %v131 = vunpack.c.h.b16 %v105
    %v132 = vunpack.c.l.b16 %v106
    %v133 = vunpack.c.h.b16 %v106
    %v134 = vunpack.c.l.b16 %v107
    %v135 = vunpack.c.h.b16 %v107
    %v136 = vunpack.c.l.b16 %v108
    %v137 = vunpack.c.h.b16 %v108
    %v138 = vunpack.c.l.b16 %v109
    %v139 = vunpack.c.h.b16 %v109
    %v140 = vunpack.c.l.b16 %v110
    %v141 = vunpack.c.h.b16 %v110
    %v142 = vunpack.c.l.b16 %v111
    %v143 = vunpack.c.h.b16 %v111
    %v144 = vunpack.c.l.b16 %v112
    %v145 = vunpack.c.h.b16 %v112
    %v146 = vpack.c.b16 %v134, %v130
    %v147 = vpack.c.b16 %v135, %v131
    %v148 = vpack.c.b16 %v136, %v132
    %v149 = vpack.c.b16 %v137, %v133
    %v150 = vpack.c.b16 %v142, %v138
    %v151 = vpack.c.b16 %v143, %v139
    %v152 = vpack.c.b16 %v144, %v140
    %v153 = vpack.c.b16 %v145, %v141
    %vm162 = vcmask 261120
    %v164 = vsel %vm162, %v104, 0
    %166 = vmatpush.bf16.msra.mxu0 0
    %167 = vmatpush.bf16.msra.mxu0 0
    %168 = vmatpush.bf16.msra.mxu0 0
    %169 = vmatpush.bf16.msra.mxu0 0
    %170 = vmatpush.bf16.msra.mxu0 0
    %171 = vmatpush.bf16.msra.mxu0 0
    %172 = vmatpush.bf16.msra.mxu0 %v150
    %173 = vmatpush.bf16.msra.mxu0 %v146
    %174 = vmatmul.bf16.gmra.mxu0 %v164
    %v175 = vpop.f32.mrf.mxu0
    %v176 = vadd.f32 %v114, %v175
    %v177 = vpop.f32.mrf.mxu0
    %178 = vdwg.mxu0
    %179 = vmatpush.bf16.msra.mxu0 0
    %180 = vmatpush.bf16.msra.mxu0 0
    %181 = vmatpush.bf16.msra.mxu0 0
    %182 = vmatpush.bf16.msra.mxu0 0
    %183 = vmatpush.bf16.msra.mxu0 0
    %184 = vmatpush.bf16.msra.mxu0 0
    %185 = vmatpush.bf16.msra.mxu0 %v151
    %186 = vmatpush.bf16.msra.mxu0 %v147
    %187 = vmatmul.bf16.gmra.mxu0 %v164
    %v188 = vpop.f32.mrf.mxu0
    %v189 = vadd.f32 %v115, %v188
    %v190 = vpop.f32.mrf.mxu0
    %191 = vdwg.mxu0
    %192 = vmatpush.bf16.msra.mxu0 0
    %193 = vmatpush.bf16.msra.mxu0 0
    %194 = vmatpush.bf16.msra.mxu0 0
    %195 = vmatpush.bf16.msra.mxu0 0
    %196 = vmatpush.bf16.msra.mxu0 0
    %197 = vmatpush.bf16.msra.mxu0 0
    %198 = vmatpush.bf16.msra.mxu0 %v152
    %199 = vmatpush.bf16.msra.mxu0 %v148
    %200 = vmatmul.bf16.gmra.mxu0 %v164
    %v201 = vpop.f32.mrf.mxu0
    %v202 = vadd.f32 %v116, %v201
    %v203 = vpop.f32.mrf.mxu0
    %204 = vdwg.mxu0
    %205 = vmatpush.bf16.msra.mxu0 0
    %206 = vmatpush.bf16.msra.mxu0 0
    %207 = vmatpush.bf16.msra.mxu0 0
    %208 = vmatpush.bf16.msra.mxu0 0
    %209 = vmatpush.bf16.msra.mxu0 0
    %210 = vmatpush.bf16.msra.mxu0 0
    %211 = vmatpush.bf16.msra.mxu0 %v153
    %212 = vmatpush.bf16.msra.mxu0 %v149
    %213 = vmatmul.bf16.gmra.mxu0 %v164
    %v214 = vpop.f32.mrf.mxu0
    %v215 = vadd.f32 %v117, %v214
    %v216 = vpop.f32.mrf.mxu0
    %217 = vdwg.mxu0
    %v218 = vmul.f32 %v176, 0.2
    %v219 = vmul.f32 %v189, 0.2
    %v220 = vmul.f32 %v202, 0.2
    %v221 = vmul.f32 %v215, 0.2
    %v222 = vmax.f32 %v176, %v218
    %v223 = vmax.f32 %v189, %v219
    %v224 = vmax.f32 %v202, %v220
    %v225 = vmax.f32 %v215, %v221
    %v226 = vpack.c.bf16 %v222, %v222
    %v227 = vpack.c.bf16 %v223, %v223
    %v228 = vpack.c.bf16 %v224, %v224
    %v229 = vpack.c.bf16 %v225, %v225
    %v230 = vld [vmem:[#allocation7] sm:$0xff]
    %v231 = vld [vmem:[#allocation7 + $0x8] sm:$0xff]
    %v232 = vld [vmem:[#allocation7 + $0x10] sm:$0xff]
    %v233 = vld [vmem:[#allocation7 + $0x18] sm:$0xff]
    %v234 = vld [vmem:[#allocation7 + $0x20] sm:$0xff]
    %v235 = vld [vmem:[#allocation7 + $0x28] sm:$0xff]
    %v236 = vld [vmem:[#allocation7 + $0x30] sm:$0xff]
    %v237 = vld [vmem:[#allocation7 + $0x38] sm:$0xff]
    %v238 = vld [vmem:[#allocation7 + $0x40] sm:$0xff]
    %v239 = vld [vmem:[#allocation7 + $0x48] sm:$0xff]
    %v240 = vld [vmem:[#allocation7 + $0x50] sm:$0xff]
    %v241 = vld [vmem:[#allocation7 + $0x58] sm:$0xff]
    %v242 = vld [vmem:[#allocation7 + $0x60] sm:$0xff]
    %v243 = vld [vmem:[#allocation7 + $0x68] sm:$0xff]
    %v244 = vld [vmem:[#allocation7 + $0x70] sm:$0xff]
    %v245 = vld [vmem:[#allocation7 + $0x78] sm:$0xff]
    %v246 = vld [vmem:[#allocation7 + $0x80] sm:$0xff]
    %v247 = vld [vmem:[#allocation7 + $0x88] sm:$0xff]
    %v248 = vld [vmem:[#allocation7 + $0x90] sm:$0xff]
    %v249 = vld [vmem:[#allocation7 + $0x98] sm:$0xff]
    %v250 = vld [vmem:[#allocation7 + $0xa0] sm:$0xff]
    %v251 = vld [vmem:[#allocation7 + $0xa8] sm:$0xff]
    %v252 = vld [vmem:[#allocation7 + $0xb0] sm:$0xff]
    %v253 = vld [vmem:[#allocation7 + $0xb8] sm:$0xff]
    %v254 = vld [vmem:[#allocation7 + $0xc0] sm:$0xff]
    %v255 = vld [vmem:[#allocation7 + $0xc8] sm:$0xff]
    %v256 = vld [vmem:[#allocation7 + $0xd0] sm:$0xff]
    %v257 = vld [vmem:[#allocation7 + $0xd8] sm:$0xff]
    %v258 = vld [vmem:[#allocation7 + $0xe0] sm:$0xff]
    %v259 = vld [vmem:[#allocation7 + $0xe8] sm:$0xff]
    %v260 = vld [vmem:[#allocation7 + $0xf0] sm:$0xff]
    %v261 = vld [vmem:[#allocation7 + $0xf8] sm:$0xff]
    %v262 = vld [vmem:[#allocation7 + $0x100] sm:$0xff]
    %v263 = vld [vmem:[#allocation7 + $0x108] sm:$0xff]
    %v264 = vld [vmem:[#allocation7 + $0x110] sm:$0xff]
    %v265 = vld [vmem:[#allocation7 + $0x118] sm:$0xff]
    %v266 = vld [vmem:[#allocation7 + $0x120] sm:$0xff]
    %v267 = vld [vmem:[#allocation7 + $0x128] sm:$0xff]
    %v268 = vld [vmem:[#allocation7 + $0x130] sm:$0xff]
    %v269 = vld [vmem:[#allocation7 + $0x138] sm:$0xff]
    %v270 = vld [vmem:[#allocation7 + $0x140] sm:$0xff]
    %v271 = vld [vmem:[#allocation7 + $0x148] sm:$0xff]
    %v272 = vld [vmem:[#allocation7 + $0x150] sm:$0xff]
    %v273 = vld [vmem:[#allocation7 + $0x158] sm:$0xff]
    %v274 = vld [vmem:[#allocation7 + $0x160] sm:$0xff]
    %v275 = vld [vmem:[#allocation7 + $0x168] sm:$0xff]
    %v276 = vld [vmem:[#allocation7 + $0x170] sm:$0xff]
    %v277 = vld [vmem:[#allocation7 + $0x178] sm:$0xff]
    %v278 = vld [vmem:[#allocation7 + $0x180] sm:$0xff]
    %v279 = vld [vmem:[#allocation7 + $0x188] sm:$0xff]
    %v280 = vld [vmem:[#allocation7 + $0x190] sm:$0xff]
    %v281 = vld [vmem:[#allocation7 + $0x198] sm:$0xff]
    %v282 = vld [vmem:[#allocation7 + $0x1a0] sm:$0xff]
    %v283 = vld [vmem:[#allocation7 + $0x1a8] sm:$0xff]
    %v284 = vld [vmem:[#allocation7 + $0x1b0] sm:$0xff]
    %v285 = vld [vmem:[#allocation7 + $0x1b8] sm:$0xff]
    %v286 = vld [vmem:[#allocation7 + $0x1c0] sm:$0xff]
    %v287 = vld [vmem:[#allocation7 + $0x1c8] sm:$0xff]
    %v288 = vld [vmem:[#allocation7 + $0x1d0] sm:$0xff]
    %v289 = vld [vmem:[#allocation7 + $0x1d8] sm:$0xff]
    %v290 = vld [vmem:[#allocation7 + $0x1e0] sm:$0xff]
    %v291 = vld [vmem:[#allocation7 + $0x1e8] sm:$0xff]
    %v292 = vld [vmem:[#allocation7 + $0x1f0] sm:$0xff]
    %v293 = vld [vmem:[#allocation7 + $0x1f8] sm:$0xff]
    %v294 = vld [vmem:[#allocation7 + $0x200] sm:$0xff]
    %v295 = vld [vmem:[#allocation7 + $0x208] sm:$0xff]
    %v296 = vld [vmem:[#allocation7 + $0x210] sm:$0xff]
    %v297 = vld [vmem:[#allocation7 + $0x218] sm:$0xff]
    %v298 = vld [vmem:[#allocation7 + $0x220] sm:$0xff]
    %v299 = vld [vmem:[#allocation7 + $0x228] sm:$0xff]
    %v300 = vld [vmem:[#allocation7 + $0x230] sm:$0xff]
    %v301 = vld [vmem:[#allocation7 + $0x238] sm:$0xff]
    %v302 = vld [vmem:[#allocation7 + $0x240] sm:$0xff]
    %v303 = vld [vmem:[#allocation7 + $0x248] sm:$0xff]
    %v304 = vld [vmem:[#allocation7 + $0x250] sm:$0xff]
    %v305 = vld [vmem:[#allocation7 + $0x258] sm:$0xff]
    %v306 = vld [vmem:[#allocation7 + $0x260] sm:$0xff]
    %v307 = vld [vmem:[#allocation7 + $0x268] sm:$0xff]
    %v308 = vld [vmem:[#allocation7 + $0x270] sm:$0xff]
    %v309 = vld [vmem:[#allocation7 + $0x278] sm:$0xff]
    %v310 = vld [vmem:[#allocation7 + $0x280] sm:$0xff]
    %v311 = vld [vmem:[#allocation7 + $0x288] sm:$0xff]
    %v312 = vld [vmem:[#allocation7 + $0x290] sm:$0xff]
    %v313 = vld [vmem:[#allocation7 + $0x298] sm:$0xff]
    %v314 = vld [vmem:[#allocation7 + $0x2a0] sm:$0xff]
    %v315 = vld [vmem:[#allocation7 + $0x2a8] sm:$0xff]
    %v316 = vld [vmem:[#allocation7 + $0x2b0] sm:$0xff]
    %v317 = vld [vmem:[#allocation7 + $0x2b8] sm:$0xff]
    %v318 = vld [vmem:[#allocation7 + $0x2c0] sm:$0xff]
    %v319 = vld [vmem:[#allocation7 + $0x2c8] sm:$0xff]
    %v320 = vld [vmem:[#allocation7 + $0x2d0] sm:$0xff]
    %v321 = vld [vmem:[#allocation7 + $0x2d8] sm:$0xff]
    %v322 = vld [vmem:[#allocation7 + $0x2e0] sm:$0xff]
    %v323 = vld [vmem:[#allocation7 + $0x2e8] sm:$0xff]
    %v324 = vld [vmem:[#allocation7 + $0x2f0] sm:$0xff]
    %v325 = vld [vmem:[#allocation7 + $0x2f8] sm:$0xff]
    %v326 = vld [vmem:[#allocation7 + $0x300] sm:$0xff]
    %v327 = vld [vmem:[#allocation7 + $0x308] sm:$0xff]
    %v328 = vld [vmem:[#allocation7 + $0x310] sm:$0xff]
    %v329 = vld [vmem:[#allocation7 + $0x318] sm:$0xff]
    %v330 = vld [vmem:[#allocation7 + $0x320] sm:$0xff]
    %v331 = vld [vmem:[#allocation7 + $0x328] sm:$0xff]
    %v332 = vld [vmem:[#allocation7 + $0x330] sm:$0xff]
    %v333 = vld [vmem:[#allocation7 + $0x338] sm:$0xff]
    %v334 = vld [vmem:[#allocation7 + $0x340] sm:$0xff]
    %v335 = vld [vmem:[#allocation7 + $0x348] sm:$0xff]
    %v336 = vld [vmem:[#allocation7 + $0x350] sm:$0xff]
    %v337 = vld [vmem:[#allocation7 + $0x358] sm:$0xff]
    %v338 = vld [vmem:[#allocation7 + $0x360] sm:$0xff]
    %v339 = vld [vmem:[#allocation7 + $0x368] sm:$0xff]
    %v340 = vld [vmem:[#allocation7 + $0x370] sm:$0xff]
    %v341 = vld [vmem:[#allocation7 + $0x378] sm:$0xff]
    %v342 = vld [vmem:[#allocation7 + $0x380] sm:$0xff]
    %v343 = vld [vmem:[#allocation7 + $0x388] sm:$0xff]
    %v344 = vld [vmem:[#allocation7 + $0x390] sm:$0xff]
    %v345 = vld [vmem:[#allocation7 + $0x398] sm:$0xff]
    %v346 = vld [vmem:[#allocation7 + $0x3a0] sm:$0xff]
    %v347 = vld [vmem:[#allocation7 + $0x3a8] sm:$0xff]
    %v348 = vld [vmem:[#allocation7 + $0x3b0] sm:$0xff]
    %v349 = vld [vmem:[#allocation7 + $0x3b8] sm:$0xff]
    %v350 = vld [vmem:[#allocation7 + $0x3c0] sm:$0xff]
    %v351 = vld [vmem:[#allocation7 + $0x3c8] sm:$0xff]
    %v352 = vld [vmem:[#allocation7 + $0x3d0] sm:$0xff]
    %v353 = vld [vmem:[#allocation7 + $0x3d8] sm:$0xff]
    %v354 = vld [vmem:[#allocation7 + $0x3e0] sm:$0xff]
    %v355 = vld [vmem:[#allocation7 + $0x3e8] sm:$0xff]
    %v356 = vld [vmem:[#allocation7 + $0x3f0] sm:$0xff]
    %v357 = vld [vmem:[#allocation7 + $0x3f8] sm:$0xff]
    %v486 = vunpack.c.l.b16 %v230
    %v487 = vunpack.c.h.b16 %v230
    %v488 = vunpack.c.l.b16 %v231
    %v489 = vunpack.c.h.b16 %v231
    %v490 = vunpack.c.l.b16 %v232
    %v491 = vunpack.c.h.b16 %v232
    %v492 = vunpack.c.l.b16 %v233
    %v493 = vunpack.c.h.b16 %v233
    %v494 = vunpack.c.l.b16 %v234
    %v495 = vunpack.c.h.b16 %v234
    %v496 = vunpack.c.l.b16 %v235
    %v497 = vunpack.c.h.b16 %v235
    %v498 = vunpack.c.l.b16 %v236
    %v499 = vunpack.c.h.b16 %v236
    %v500 = vunpack.c.l.b16 %v237
    %v501 = vunpack.c.h.b16 %v237
    %v502 = vunpack.c.l.b16 %v238
    %v503 = vunpack.c.h.b16 %v238
    %v504 = vunpack.c.l.b16 %v239
    %v505 = vunpack.c.h.b16 %v239
    %v506 = vunpack.c.l.b16 %v240
    %v507 = vunpack.c.h.b16 %v240
    %v508 = vunpack.c.l.b16 %v241
    %v509 = vunpack.c.h.b16 %v241
    %v510 = vunpack.c.l.b16 %v242
    %v511 = vunpack.c.h.b16 %v242
    %v512 = vunpack.c.l.b16 %v243
    %v513 = vunpack.c.h.b16 %v243
    %v514 = vunpack.c.l.b16 %v244
    %v515 = vunpack.c.h.b16 %v244
    %v516 = vunpack.c.l.b16 %v245
    %v517 = vunpack.c.h.b16 %v245
    %v518 = vunpack.c.l.b16 %v246
    %v519 = vunpack.c.h.b16 %v246
    %v520 = vunpack.c.l.b16 %v247
    %v521 = vunpack.c.h.b16 %v247
    %v522 = vunpack.c.l.b16 %v248
    %v523 = vunpack.c.h.b16 %v248
    %v524 = vunpack.c.l.b16 %v249
    %v525 = vunpack.c.h.b16 %v249
    %v526 = vunpack.c.l.b16 %v250
    %v527 = vunpack.c.h.b16 %v250
    %v528 = vunpack.c.l.b16 %v251
    %v529 = vunpack.c.h.b16 %v251
    %v530 = vunpack.c.l.b16 %v252
    %v531 = vunpack.c.h.b16 %v252
    %v532 = vunpack.c.l.b16 %v253
    %v533 = vunpack.c.h.b16 %v253
    %v534 = vunpack.c.l.b16 %v254
    %v535 = vunpack.c.h.b16 %v254
    %v536 = vunpack.c.l.b16 %v255
    %v537 = vunpack.c.h.b16 %v255
    %v538 = vunpack.c.l.b16 %v256
    %v539 = vunpack.c.h.b16 %v256
    %v540 = vunpack.c.l.b16 %v257
    %v541 = vunpack.c.h.b16 %v257
    %v542 = vunpack.c.l.b16 %v258
    %v543 = vunpack.c.h.b16 %v258
    %v544 = vunpack.c.l.b16 %v259
    %v545 = vunpack.c.h.b16 %v259
    %v546 = vunpack.c.l.b16 %v260
    %v547 = vunpack.c.h.b16 %v260
    %v548 = vunpack.c.l.b16 %v261
    %v549 = vunpack.c.h.b16 %v261
    %v550 = vunpack.c.l.b16 %v262
    %v551 = vunpack.c.h.b16 %v262
    %v552 = vunpack.c.l.b16 %v263
    %v553 = vunpack.c.h.b16 %v263
    %v554 = vunpack.c.l.b16 %v264
    %v555 = vunpack.c.h.b16 %v264
    %v556 = vunpack.c.l.b16 %v265
    %v557 = vunpack.c.h.b16 %v265
    %v558 = vunpack.c.l.b16 %v266
    %v559 = vunpack.c.h.b16 %v266
    %v560 = vunpack.c.l.b16 %v267
    %v561 = vunpack.c.h.b16 %v267
    %v562 = vunpack.c.l.b16 %v268
    %v563 = vunpack.c.h.b16 %v268
    %v564 = vunpack.c.l.b16 %v269
    %v565 = vunpack.c.h.b16 %v269
    %v566 = vunpack.c.l.b16 %v270
    %v567 = vunpack.c.h.b16 %v270
    %v568 = vunpack.c.l.b16 %v271
    %v569 = vunpack.c.h.b16 %v271
    %v570 = vunpack.c.l.b16 %v272
    %v571 = vunpack.c.h.b16 %v272
    %v572 = vunpack.c.l.b16 %v273
    %v573 = vunpack.c.h.b16 %v273
    %v574 = vunpack.c.l.b16 %v274
    %v575 = vunpack.c.h.b16 %v274
    %v576 = vunpack.c.l.b16 %v275
    %v577 = vunpack.c.h.b16 %v275
    %v578 = vunpack.c.l.b16 %v276
    %v579 = vunpack.c.h.b16 %v276
    %v580 = vunpack.c.l.b16 %v277
    %v581 = vunpack.c.h.b16 %v277
    %v582 = vunpack.c.l.b16 %v278
    %v583 = vunpack.c.h.b16 %v278
    %v584 = vunpack.c.l.b16 %v279
    %v585 = vunpack.c.h.b16 %v279
    %v586 = vunpack.c.l.b16 %v280
    %v587 = vunpack.c.h.b16 %v280
    %v588 = vunpack.c.l.b16 %v281
    %v589 = vunpack.c.h.b16 %v281
    %v590 = vunpack.c.l.b16 %v282
    %v591 = vunpack.c.h.b16 %v282
    %v592 = vunpack.c.l.b16 %v283
    %v593 = vunpack.c.h.b16 %v283
    %v594 = vunpack.c.l.b16 %v284
    %v595 = vunpack.c.h.b16 %v284
    %v596 = vunpack.c.l.b16 %v285
    %v597 = vunpack.c.h.b16 %v285
    %v598 = vunpack.c.l.b16 %v286
    %v599 = vunpack.c.h.b16 %v286
    %v600 = vunpack.c.l.b16 %v287
    %v601 = vunpack.c.h.b16 %v287
    %v602 = vunpack.c.l.b16 %v288
    %v603 = vunpack.c.h.b16 %v288
    %v604 = vunpack.c.l.b16 %v289
    %v605 = vunpack.c.h.b16 %v289
    %v606 = vunpack.c.l.b16 %v290
    %v607 = vunpack.c.h.b16 %v290
    %v608 = vunpack.c.l.b16 %v291
    %v609 = vunpack.c.h.b16 %v291
    %v610 = vunpack.c.l.b16 %v292
    %v611 = vunpack.c.h.b16 %v292
    %v612 = vunpack.c.l.b16 %v293
    %v613 = vunpack.c.h.b16 %v293
    %v614 = vunpack.c.l.b16 %v294
    %v615 = vunpack.c.h.b16 %v294
    %v616 = vunpack.c.l.b16 %v295
    %v617 = vunpack.c.h.b16 %v295
    %v618 = vunpack.c.l.b16 %v296
    %v619 = vunpack.c.h.b16 %v296
    %v620 = vunpack.c.l.b16 %v297
    %v621 = vunpack.c.h.b16 %v297
    %v622 = vunpack.c.l.b16 %v298
    %v623 = vunpack.c.h.b16 %v298
    %v624 = vunpack.c.l.b16 %v299
    %v625 = vunpack.c.h.b16 %v299
    %v626 = vunpack.c.l.b16 %v300
    %v627 = vunpack.c.h.b16 %v300
    %v628 = vunpack.c.l.b16 %v301
    %v629 = vunpack.c.h.b16 %v301
    %v630 = vunpack.c.l.b16 %v302
    %v631 = vunpack.c.h.b16 %v302
    %v632 = vunpack.c.l.b16 %v303
    %v633 = vunpack.c.h.b16 %v303
    %v634 = vunpack.c.l.b16 %v304
    %v635 = vunpack.c.h.b16 %v304
    %v636 = vunpack.c.l.b16 %v305
    %v637 = vunpack.c.h.b16 %v305
    %v638 = vunpack.c.l.b16 %v306
    %v639 = vunpack.c.h.b16 %v306
    %v640 = vunpack.c.l.b16 %v307
    %v641 = vunpack.c.h.b16 %v307
    %v642 = vunpack.c.l.b16 %v308
    %v643 = vunpack.c.h.b16 %v308
    %v644 = vunpack.c.l.b16 %v309
    %v645 = vunpack.c.h.b16 %v309
    %v646 = vunpack.c.l.b16 %v310
    %v647 = vunpack.c.h.b16 %v310
    %v648 = vunpack.c.l.b16 %v311
    %v649 = vunpack.c.h.b16 %v311
    %v650 = vunpack.c.l.b16 %v312
    %v651 = vunpack.c.h.b16 %v312
    %v652 = vunpack.c.l.b16 %v313
    %v653 = vunpack.c.h.b16 %v313
    %v654 = vunpack.c.l.b16 %v314
    %v655 = vunpack.c.h.b16 %v314
    %v656 = vunpack.c.l.b16 %v315
    %v657 = vunpack.c.h.b16 %v315
    %v658 = vunpack.c.l.b16 %v316
    %v659 = vunpack.c.h.b16 %v316
    %v660 = vunpack.c.l.b16 %v317
    %v661 = vunpack.c.h.b16 %v317
    %v662 = vunpack.c.l.b16 %v318
    %v663 = vunpack.c.h.b16 %v318
    %v664 = vunpack.c.l.b16 %v319
    %v665 = vunpack.c.h.b16 %v319
    %v666 = vunpack.c.l.b16 %v320
    %v667 = vunpack.c.h.b16 %v320
    %v668 = vunpack.c.l.b16 %v321
    %v669 = vunpack.c.h.b16 %v321
    %v670 = vunpack.c.l.b16 %v322
    %v671 = vunpack.c.h.b16 %v322
    %v672 = vunpack.c.l.b16 %v323
    %v673 = vunpack.c.h.b16 %v323
    %v674 = vunpack.c.l.b16 %v324
    %v675 = vunpack.c.h.b16 %v324
    %v676 = vunpack.c.l.b16 %v325
    %v677 = vunpack.c.h.b16 %v325
    %v678 = vunpack.c.l.b16 %v326
    %v679 = vunpack.c.h.b16 %v326
    %v680 = vunpack.c.l.b16 %v327
    %v681 = vunpack.c.h.b16 %v327
    %v682 = vunpack.c.l.b16 %v328
    %v683 = vunpack.c.h.b16 %v328
    %v684 = vunpack.c.l.b16 %v329
    %v685 = vunpack.c.h.b16 %v329
    %v686 = vunpack.c.l.b16 %v330
    %v687 = vunpack.c.h.b16 %v330
    %v688 = vunpack.c.l.b16 %v331
    %v689 = vunpack.c.h.b16 %v331
    %v690 = vunpack.c.l.b16 %v332
    %v691 = vunpack.c.h.b16 %v332
    %v692 = vunpack.c.l.b16 %v333
    %v693 = vunpack.c.h.b16 %v333
    %v694 = vunpack.c.l.b16 %v334
    %v695 = vunpack.c.h.b16 %v334
    %v696 = vunpack.c.l.b16 %v335
    %v697 = vunpack.c.h.b16 %v335
    %v698 = vunpack.c.l.b16 %v336
    %v699 = vunpack.c.h.b16 %v336
    %v700 = vunpack.c.l.b16 %v337
    %v701 = vunpack.c.h.b16 %v337
    %v702 = vunpack.c.l.b16 %v338
    %v703 = vunpack.c.h.b16 %v338
    %v704 = vunpack.c.l.b16 %v339
    %v705 = vunpack.c.h.b16 %v339
    %v706 = vunpack.c.l.b16 %v340
    %v707 = vunpack.c.h.b16 %v340
    %v708 = vunpack.c.l.b16 %v341
    %v709 = vunpack.c.h.b16 %v341
    %v710 = vunpack.c.l.b16 %v342
    %v711 = vunpack.c.h.b16 %v342
    %v712 = vunpack.c.l.b16 %v343
    %v713 = vunpack.c.h.b16 %v343
    %v714 = vunpack.c.l.b16 %v344
    %v715 = vunpack.c.h.b16 %v344
    %v716 = vunpack.c.l.b16 %v345
    %v717 = vunpack.c.h.b16 %v345
    %v718 = vunpack.c.l.b16 %v346
    %v719 = vunpack.c.h.b16 %v346
    %v720 = vunpack.c.l.b16 %v347
    %v721 = vunpack.c.h.b16 %v347
    %v722 = vunpack.c.l.b16 %v348
    %v723 = vunpack.c.h.b16 %v348
    %v724 = vunpack.c.l.b16 %v349
    %v725 = vunpack.c.h.b16 %v349
    %v726 = vunpack.c.l.b16 %v350
    %v727 = vunpack.c.h.b16 %v350
    %v728 = vunpack.c.l.b16 %v351
    %v729 = vunpack.c.h.b16 %v351
    %v730 = vunpack.c.l.b16 %v352
    %v731 = vunpack.c.h.b16 %v352
    %v732 = vunpack.c.l.b16 %v353
    %v733 = vunpack.c.h.b16 %v353
    %v734 = vunpack.c.l.b16 %v354
    %v735 = vunpack.c.h.b16 %v354
    %v736 = vunpack.c.l.b16 %v355
    %v737 = vunpack.c.h.b16 %v355
    %v738 = vunpack.c.l.b16 %v356
    %v739 = vunpack.c.h.b16 %v356
    %v740 = vunpack.c.l.b16 %v357
    %v741 = vunpack.c.h.b16 %v357
    %v742 = vpack.c.b16 %v490, %v486
    %v743 = vpack.c.b16 %v491, %v487
    %v744 = vpack.c.b16 %v492, %v488
    %v745 = vpack.c.b16 %v493, %v489
    %v746 = vpack.c.b16 %v498, %v494
    %v747 = vpack.c.b16 %v499, %v495
    %v748 = vpack.c.b16 %v500, %v496
    %v749 = vpack.c.b16 %v501, %v497
    %v750 = vpack.c.b16 %v506, %v502
    %v751 = vpack.c.b16 %v507, %v503
    %v752 = vpack.c.b16 %v508, %v504
    %v753 = vpack.c.b16 %v509, %v505
    %v754 = vpack.c.b16 %v514, %v510
    %v755 = vpack.c.b16 %v515, %v511
    %v756 = vpack.c.b16 %v516, %v512
    %v757 = vpack.c.b16 %v517, %v513
    %v758 = vpack.c.b16 %v522, %v518
    %v759 = vpack.c.b16 %v523, %v519
    %v760 = vpack.c.b16 %v524, %v520
    %v761 = vpack.c.b16 %v525, %v521
    %v762 = vpack.c.b16 %v530, %v526
    %v763 = vpack.c.b16 %v531, %v527
    %v764 = vpack.c.b16 %v532, %v528
    %v765 = vpack.c.b16 %v533, %v529
    %v766 = vpack.c.b16 %v538, %v534
    %v767 = vpack.c.b16 %v539, %v535
    %v768 = vpack.c.b16 %v540, %v536
    %v769 = vpack.c.b16 %v541, %v537
    %v770 = vpack.c.b16 %v546, %v542
    %v771 = vpack.c.b16 %v547, %v543
    %v772 = vpack.c.b16 %v548, %v544
    %v773 = vpack.c.b16 %v549, %v545
    %v774 = vpack.c.b16 %v554, %v550
    %v775 = vpack.c.b16 %v555, %v551
    %v776 = vpack.c.b16 %v556, %v552
    %v777 = vpack.c.b16 %v557, %v553
    %v778 = vpack.c.b16 %v562, %v558
    %v779 = vpack.c.b16 %v563, %v559
    %v780 = vpack.c.b16 %v564, %v560
    %v781 = vpack.c.b16 %v565, %v561
    %v782 = vpack.c.b16 %v570, %v566
    %v783 = vpack.c.b16 %v571, %v567
    %v784 = vpack.c.b16 %v572, %v568
    %v785 = vpack.c.b16 %v573, %v569
    %v786 = vpack.c.b16 %v578, %v574
    %v787 = vpack.c.b16 %v579, %v575
    %v788 = vpack.c.b16 %v580, %v576
    %v789 = vpack.c.b16 %v581, %v577
    %v790 = vpack.c.b16 %v586, %v582
    %v791 = vpack.c.b16 %v587, %v583
    %v792 = vpack.c.b16 %v588, %v584
    %v793 = vpack.c.b16 %v589, %v585
    %v794 = vpack.c.b16 %v594, %v590
    %v795 = vpack.c.b16 %v595, %v591
    %v796 = vpack.c.b16 %v596, %v592
    %v797 = vpack.c.b16 %v597, %v593
    %v798 = vpack.c.b16 %v602, %v598
    %v799 = vpack.c.b16 %v603, %v599
    %v800 = vpack.c.b16 %v604, %v600
    %v801 = vpack.c.b16 %v605, %v601
    %v802 = vpack.c.b16 %v610, %v606
    %v803 = vpack.c.b16 %v611, %v607
    %v804 = vpack.c.b16 %v612, %v608
    %v805 = vpack.c.b16 %v613, %v609
    %v806 = vpack.c.b16 %v618, %v614
    %v807 = vpack.c.b16 %v619, %v615
    %v808 = vpack.c.b16 %v620, %v616
    %v809 = vpack.c.b16 %v621, %v617
    %v810 = vpack.c.b16 %v626, %v622
    %v811 = vpack.c.b16 %v627, %v623
    %v812 = vpack.c.b16 %v628, %v624
    %v813 = vpack.c.b16 %v629, %v625
    %v814 = vpack.c.b16 %v634, %v630
    %v815 = vpack.c.b16 %v635, %v631
    %v816 = vpack.c.b16 %v636, %v632
    %v817 = vpack.c.b16 %v637, %v633
    %v818 = vpack.c.b16 %v642, %v638
    %v819 = vpack.c.b16 %v643, %v639
    %v820 = vpack.c.b16 %v644, %v640
    %v821 = vpack.c.b16 %v645, %v641
    %v822 = vpack.c.b16 %v650, %v646
    %v823 = vpack.c.b16 %v651, %v647
    %v824 = vpack.c.b16 %v652, %v648
    %v825 = vpack.c.b16 %v653, %v649
    %v826 = vpack.c.b16 %v658, %v654
    %v827 = vpack.c.b16 %v659, %v655
    %v828 = vpack.c.b16 %v660, %v656
    %v829 = vpack.c.b16 %v661, %v657
    %v830 = vpack.c.b16 %v666, %v662
    %v831 = vpack.c.b16 %v667, %v663
    %v832 = vpack.c.b16 %v668, %v664
    %v833 = vpack.c.b16 %v669, %v665
    %v834 = vpack.c.b16 %v674, %v670
    %v835 = vpack.c.b16 %v675, %v671
    %v836 = vpack.c.b16 %v676, %v672
    %v837 = vpack.c.b16 %v677, %v673
    %v838 = vpack.c.b16 %v682, %v678
    %v839 = vpack.c.b16 %v683, %v679
    %v840 = vpack.c.b16 %v684, %v680
    %v841 = vpack.c.b16 %v685, %v681
    %v842 = vpack.c.b16 %v690, %v686
    %v843 = vpack.c.b16 %v691, %v687
    %v844 = vpack.c.b16 %v692, %v688
    %v845 = vpack.c.b16 %v693, %v689
    %v846 = vpack.c.b16 %v698, %v694
    %v847 = vpack.c.b16 %v699, %v695
    %v848 = vpack.c.b16 %v700, %v696
    %v849 = vpack.c.b16 %v701, %v697
    %v850 = vpack.c.b16 %v706, %v702
    %v851 = vpack.c.b16 %v707, %v703
    %v852 = vpack.c.b16 %v708, %v704
    %v853 = vpack.c.b16 %v709, %v705
    %v854 = vpack.c.b16 %v714, %v710
    %v855 = vpack.c.b16 %v715, %v711
    %v856 = vpack.c.b16 %v716, %v712
    %v857 = vpack.c.b16 %v717, %v713
    %v858 = vpack.c.b16 %v722, %v718
    %v859 = vpack.c.b16 %v723, %v719
    %v860 = vpack.c.b16 %v724, %v720
    %v861 = vpack.c.b16 %v725, %v721
    %v862 = vpack.c.b16 %v730, %v726
    %v863 = vpack.c.b16 %v731, %v727
    %v864 = vpack.c.b16 %v732, %v728
    %v865 = vpack.c.b16 %v733, %v729
    %v866 = vpack.c.b16 %v738, %v734
    %v867 = vpack.c.b16 %v739, %v735
    %v868 = vpack.c.b16 %v740, %v736
    %v869 = vpack.c.b16 %v741, %v737
    %998 = vmatpush.bf16.msra.mxu0 %v770
    %999 = vmatpush.bf16.msra.mxu0 %v766
    %1000 = vmatpush.bf16.msra.mxu0 %v762
    %1001 = vmatpush.bf16.msra.mxu0 %v758
    %1002 = vmatpush.bf16.msra.mxu0 %v754
    %1003 = vmatpush.bf16.msra.mxu0 %v750
    %1004 = vmatpush.bf16.msra.mxu0 %v746
    %1005 = vmatpush.bf16.msra.mxu0 %v742
    %1006 = vmatmul.bf16.gmra.mxu0 %v226
    %v1007 = vpop.f32.mrf.mxu0
    %v1008 = vadd.f32 0.0, %v1007
    %v1009 = vpop.f32.mrf.mxu0
    %1010 = vdwg.mxu0
    %1011 = vmatpush.bf16.msra.mxu0 %v802
    %1012 = vmatpush.bf16.msra.mxu0 %v798
    %1013 = vmatpush.bf16.msra.mxu0 %v794
    %1014 = vmatpush.bf16.msra.mxu0 %v790
    %1015 = vmatpush.bf16.msra.mxu0 %v786
    %1016 = vmatpush.bf16.msra.mxu0 %v782
    %1017 = vmatpush.bf16.msra.mxu0 %v778
    %1018 = vmatpush.bf16.msra.mxu0 %v774
    %1019 = vmatmul.bf16.gmra.mxu0 %v227
    %v1020 = vpop.f32.mrf.mxu0
    %v1021 = vadd.f32 %v1008, %v1020
    %v1022 = vpop.f32.mrf.mxu0
    %1023 = vdwg.mxu0
    %1024 = vmatpush.bf16.msra.mxu0 %v834
    %1025 = vmatpush.bf16.msra.mxu0 %v830
    %1026 = vmatpush.bf16.msra.mxu0 %v826
    %1027 = vmatpush.bf16.msra.mxu0 %v822
    %1028 = vmatpush.bf16.msra.mxu0 %v818
    %1029 = vmatpush.bf16.msra.mxu0 %v814
    %1030 = vmatpush.bf16.msra.mxu0 %v810
    %1031 = vmatpush.bf16.msra.mxu0 %v806
    %1032 = vmatmul.bf16.gmra.mxu0 %v228
    %v1033 = vpop.f32.mrf.mxu0
    %v1034 = vadd.f32 %v1021, %v1033
    %v1035 = vpop.f32.mrf.mxu0
    %1036 = vdwg.mxu0
    %1037 = vmatpush.bf16.msra.mxu0 %v866
    %1038 = vmatpush.bf16.msra.mxu0 %v862
    %1039 = vmatpush.bf16.msra.mxu0 %v858
    %1040 = vmatpush.bf16.msra.mxu0 %v854
    %1041 = vmatpush.bf16.msra.mxu0 %v850
    %1042 = vmatpush.bf16.msra.mxu0 %v846
    %1043 = vmatpush.bf16.msra.mxu0 %v842
    %1044 = vmatpush.bf16.msra.mxu0 %v838
    %1045 = vmatmul.bf16.gmra.mxu0 %v229
    %v1046 = vpop.f32.mrf.mxu0
    %v1047 = vadd.f32 %v1034, %v1046
    %v1048 = vpop.f32.mrf.mxu0
    %1049 = vdwg.mxu0
    %1050 = vmatpush.bf16.msra.mxu0 %v771
    %1051 = vmatpush.bf16.msra.mxu0 %v767
    %1052 = vmatpush.bf16.msra.mxu0 %v763
    %1053 = vmatpush.bf16.msra.mxu0 %v759
    %1054 = vmatpush.bf16.msra.mxu0 %v755
    %1055 = vmatpush.bf16.msra.mxu0 %v751
    %1056 = vmatpush.bf16.msra.mxu0 %v747
    %1057 = vmatpush.bf16.msra.mxu0 %v743
    %1058 = vmatmul.bf16.gmra.mxu0 %v226
    %v1059 = vpop.f32.mrf.mxu0
    %v1060 = vadd.f32 0.0, %v1059
    %v1061 = vpop.f32.mrf.mxu0
    %1062 = vdwg.mxu0
    %1063 = vmatpush.bf16.msra.mxu0 %v803
    %1064 = vmatpush.bf16.msra.mxu0 %v799
    %1065 = vmatpush.bf16.msra.mxu0 %v795
    %1066 = vmatpush.bf16.msra.mxu0 %v791
    %1067 = vmatpush.bf16.msra.mxu0 %v787
    %1068 = vmatpush.bf16.msra.mxu0 %v783
    %1069 = vmatpush.bf16.msra.mxu0 %v779
    %1070 = vmatpush.bf16.msra.mxu0 %v775
    %1071 = vmatmul.bf16.gmra.mxu0 %v227
    %v1072 = vpop.f32.mrf.mxu0
    %v1073 = vadd.f32 %v1060, %v1072
    %v1074 = vpop.f32.mrf.mxu0
    %1075 = vdwg.mxu0
    %1076 = vmatpush.bf16.msra.mxu0 %v835
    %1077 = vmatpush.bf16.msra.mxu0 %v831
    %1078 = vmatpush.bf16.msra.mxu0 %v827
    %1079 = vmatpush.bf16.msra.mxu0 %v823
    %1080 = vmatpush.bf16.msra.mxu0 %v819
    %1081 = vmatpush.bf16.msra.mxu0 %v815
    %1082 = vmatpush.bf16.msra.mxu0 %v811
    %1083 = vmatpush.bf16.msra.mxu0 %v807
    %1084 = vmatmul.bf16.gmra.mxu0 %v228
    %v1085 = vpop.f32.mrf.mxu0
    %v1086 = vadd.f32 %v1073, %v1085
    %v1087 = vpop.f32.mrf.mxu0
    %1088 = vdwg.mxu0
    %1089 = vmatpush.bf16.msra.mxu0 %v867
    %1090 = vmatpush.bf16.msra.mxu0 %v863
    %1091 = vmatpush.bf16.msra.mxu0 %v859
    %1092 = vmatpush.bf16.msra.mxu0 %v855
    %1093 = vmatpush.bf16.msra.mxu0 %v851
    %1094 = vmatpush.bf16.msra.mxu0 %v847
    %1095 = vmatpush.bf16.msra.mxu0 %v843
    %1096 = vmatpush.bf16.msra.mxu0 %v839
    %1097 = vmatmul.bf16.gmra.mxu0 %v229
    %v1098 = vpop.f32.mrf.mxu0
    %v1099 = vadd.f32 %v1086, %v1098
    %v1100 = vpop.f32.mrf.mxu0
    %1101 = vdwg.mxu0
    %1102 = vmatpush.bf16.msra.mxu0 %v772
    %1103 = vmatpush.bf16.msra.mxu0 %v768
    %1104 = vmatpush.bf16.msra.mxu0 %v764
    %1105 = vmatpush.bf16.msra.mxu0 %v760
    %1106 = vmatpush.bf16.msra.mxu0 %v756
    %1107 = vmatpush.bf16.msra.mxu0 %v752
    %1108 = vmatpush.bf16.msra.mxu0 %v748
    %1109 = vmatpush.bf16.msra.mxu0 %v744
    %1110 = vmatmul.bf16.gmra.mxu0 %v226
    %v1111 = vpop.f32.mrf.mxu0
    %v1112 = vadd.f32 0.0, %v1111
    %v1113 = vpop.f32.mrf.mxu0
    %1114 = vdwg.mxu0
    %1115 = vmatpush.bf16.msra.mxu0 %v804
    %1116 = vmatpush.bf16.msra.mxu0 %v800
    %1117 = vmatpush.bf16.msra.mxu0 %v796
    %1118 = vmatpush.bf16.msra.mxu0 %v792
    %1119 = vmatpush.bf16.msra.mxu0 %v788
    %1120 = vmatpush.bf16.msra.mxu0 %v784
    %1121 = vmatpush.bf16.msra.mxu0 %v780
    %1122 = vmatpush.bf16.msra.mxu0 %v776
    %1123 = vmatmul.bf16.gmra.mxu0 %v227
    %v1124 = vpop.f32.mrf.mxu0
    %v1125 = vadd.f32 %v1112, %v1124
    %v1126 = vpop.f32.mrf.mxu0
    %1127 = vdwg.mxu0
    %1128 = vmatpush.bf16.msra.mxu0 %v836
    %1129 = vmatpush.bf16.msra.mxu0 %v832
    %1130 = vmatpush.bf16.msra.mxu0 %v828
    %1131 = vmatpush.bf16.msra.mxu0 %v824
    %1132 = vmatpush.bf16.msra.mxu0 %v820
    %1133 = vmatpush.bf16.msra.mxu0 %v816
    %1134 = vmatpush.bf16.msra.mxu0 %v812
    %1135 = vmatpush.bf16.msra.mxu0 %v808
    %1136 = vmatmul.bf16.gmra.mxu0 %v228
    %v1137 = vpop.f32.mrf.mxu0
    %v1138 = vadd.f32 %v1125, %v1137
    %v1139 = vpop.f32.mrf.mxu0
    %1140 = vdwg.mxu0
    %1141 = vmatpush.bf16.msra.mxu0 %v868
    %1142 = vmatpush.bf16.msra.mxu0 %v864
    %1143 = vmatpush.bf16.msra.mxu0 %v860
    %1144 = vmatpush.bf16.msra.mxu0 %v856
    %1145 = vmatpush.bf16.msra.mxu0 %v852
    %1146 = vmatpush.bf16.msra.mxu0 %v848
    %1147 = vmatpush.bf16.msra.mxu0 %v844
    %1148 = vmatpush.bf16.msra.mxu0 %v840
    %1149 = vmatmul.bf16.gmra.mxu0 %v229
    %v1150 = vpop.f32.mrf.mxu0
    %v1151 = vadd.f32 %v1138, %v1150
    %v1152 = vpop.f32.mrf.mxu0
    %1153 = vdwg.mxu0
    %1154 = vmatpush.bf16.msra.mxu0 %v773
    %1155 = vmatpush.bf16.msra.mxu0 %v769
    %1156 = vmatpush.bf16.msra.mxu0 %v765
    %1157 = vmatpush.bf16.msra.mxu0 %v761
    %1158 = vmatpush.bf16.msra.mxu0 %v757
    %1159 = vmatpush.bf16.msra.mxu0 %v753
    %1160 = vmatpush.bf16.msra.mxu0 %v749
    %1161 = vmatpush.bf16.msra.mxu0 %v745
    %1162 = vmatmul.bf16.gmra.mxu0 %v226
    %v1163 = vpop.f32.mrf.mxu0
    %v1164 = vadd.f32 0.0, %v1163
    %v1165 = vpop.f32.mrf.mxu0
    %1166 = vdwg.mxu0
    %1167 = vmatpush.bf16.msra.mxu0 %v805
    %1168 = vmatpush.bf16.msra.mxu0 %v801
    %1169 = vmatpush.bf16.msra.mxu0 %v797
    %1170 = vmatpush.bf16.msra.mxu0 %v793
    %1171 = vmatpush.bf16.msra.mxu0 %v789
    %1172 = vmatpush.bf16.msra.mxu0 %v785
    %1173 = vmatpush.bf16.msra.mxu0 %v781
    %1174 = vmatpush.bf16.msra.mxu0 %v777
    %1175 = vmatmul.bf16.gmra.mxu0 %v227
    %v1176 = vpop.f32.mrf.mxu0
    %v1177 = vadd.f32 %v1164, %v1176
    %v1178 = vpop.f32.mrf.mxu0
    %1179 = vdwg.mxu0
    %1180 = vmatpush.bf16.msra.mxu0 %v837
    %1181 = vmatpush.bf16.msra.mxu0 %v833
    %1182 = vmatpush.bf16.msra.mxu0 %v829
    %1183 = vmatpush.bf16.msra.mxu0 %v825
    %1184 = vmatpush.bf16.msra.mxu0 %v821
    %1185 = vmatpush.bf16.msra.mxu0 %v817
    %1186 = vmatpush.bf16.msra.mxu0 %v813
    %1187 = vmatpush.bf16.msra.mxu0 %v809
    %1188 = vmatmul.bf16.gmra.mxu0 %v228
    %v1189 = vpop.f32.mrf.mxu0
    %v1190 = vadd.f32 %v1177, %v1189
    %v1191 = vpop.f32.mrf.mxu0
    %1192 = vdwg.mxu0
    %1193 = vmatpush.bf16.msra.mxu0 %v869
    %1194 = vmatpush.bf16.msra.mxu0 %v865
    %1195 = vmatpush.bf16.msra.mxu0 %v861
    %1196 = vmatpush.bf16.msra.mxu0 %v857
    %1197 = vmatpush.bf16.msra.mxu0 %v853
    %1198 = vmatpush.bf16.msra.mxu0 %v849
    %1199 = vmatpush.bf16.msra.mxu0 %v845
    %1200 = vmatpush.bf16.msra.mxu0 %v841
    %1201 = vmatmul.bf16.gmra.mxu0 %v229
    %v1202 = vpop.f32.mrf.mxu0
    %v1203 = vadd.f32 %v1190, %v1202
    %v1204 = vpop.f32.mrf.mxu0
    %1205 = vdwg.mxu0
    %v1207 = vperm.slane %v100, 0
    %v1208 = vperm.slane %v100, 1
    %v1209 = vperm.slane %v100, 2
    %v1210 = vperm.slane %v100, 3
    %v1215 = vmul.f32 %v1047, %v1207
    %v1216 = vmul.f32 %v1099, %v1208
    %v1217 = vmul.f32 %v1151, %v1209
    %v1218 = vmul.f32 %v1203, %v1210
    %v1220 = vperm.slane %v97, 0
    %v1221 = vperm.slane %v97, 1
    %v1222 = vperm.slane %v97, 2
    %v1223 = vperm.slane %v97, 3
    %v1228 = vadd.f32 %v1215, %v1220
    %v1229 = vadd.f32 %v1216, %v1221
    %v1230 = vadd.f32 %v1217, %v1222
    %v1231 = vadd.f32 %v1218, %v1223
    %v1232 = vrot.slane %v1228, 4
    %v1233 = vadd.f32 %v1228, %v1232
    %v1234 = vrot.slane %v1233, 2
    %v1235 = vadd.f32 %v1233, %v1234
    %v1236 = vrot.slane %v1235, 1
    %v1237 = vadd.f32 %v1235, %v1236
    %v1238 = vrot.slane %v1229, 4
    %v1239 = vadd.f32 %v1229, %v1238
    %v1240 = vrot.slane %v1239, 2
    %v1241 = vadd.f32 %v1239, %v1240
    %v1242 = vrot.slane %v1241, 1
    %v1243 = vadd.f32 %v1241, %v1242
    %v1244 = vrot.slane %v1230, 4
    %v1245 = vadd.f32 %v1230, %v1244
    %v1246 = vrot.slane %v1245, 2
    %v1247 = vadd.f32 %v1245, %v1246
    %v1248 = vrot.slane %v1247, 1
    %v1249 = vadd.f32 %v1247, %v1248
    %v1250 = vrot.slane %v1231, 4
    %v1251 = vadd.f32 %v1231, %v1250
    %v1252 = vrot.slane %v1251, 2
    %v1253 = vadd.f32 %v1251, %v1252
    %v1254 = vrot.slane %v1253, 1
    %v1255 = vadd.f32 %v1253, %v1254
    %v1256 = vrcp.pop 8.0
    %v1257 = vmul.f32 8.0, %v1256
    %v1258 = vsub.f32 1.0, %v1257
    %v1259 = vmul.f32 %v1256, %v1258
    %v1260 = vadd.f32 %v1256, %v1259
    %vm1261 = vweird.f32 %v1256
    %v1262 = vsel %vm1261, %v1256, %v1260
    %v1263 = vmul.f32 %v1237, %v1262
    %v1264 = vmul.f32 %v1243, %v1262
    %v1265 = vmul.f32 %v1249, %v1262
    %v1266 = vmul.f32 %v1255, %v1262
    %v1267 = vsub.f32 %v1228, %v1263
    %v1268 = vsub.f32 %v1229, %v1264
    %v1269 = vsub.f32 %v1230, %v1265
    %v1270 = vsub.f32 %v1231, %v1266
    %v1271 = vmul.f32 %v1267, %v1267
    %v1272 = vmul.f32 %v1268, %v1268
    %v1273 = vmul.f32 %v1269, %v1269
    %v1274 = vmul.f32 %v1270, %v1270
    %v1275 = vrot.slane %v1271, 4
    %v1276 = vadd.f32 %v1271, %v1275
    %v1277 = vrot.slane %v1276, 2
    %v1278 = vadd.f32 %v1276, %v1277
    %v1279 = vrot.slane %v1278, 1
    %v1280 = vadd.f32 %v1278, %v1279
    %v1281 = vrot.slane %v1272, 4
    %v1282 = vadd.f32 %v1272, %v1281
    %v1283 = vrot.slane %v1282, 2
    %v1284 = vadd.f32 %v1282, %v1283
    %v1285 = vrot.slane %v1284, 1
    %v1286 = vadd.f32 %v1284, %v1285
    %v1287 = vrot.slane %v1273, 4
    %v1288 = vadd.f32 %v1273, %v1287
    %v1289 = vrot.slane %v1288, 2
    %v1290 = vadd.f32 %v1288, %v1289
    %v1291 = vrot.slane %v1290, 1
    %v1292 = vadd.f32 %v1290, %v1291
    %v1293 = vrot.slane %v1274, 4
    %v1294 = vadd.f32 %v1274, %v1293
    %v1295 = vrot.slane %v1294, 2
    %v1296 = vadd.f32 %v1294, %v1295
    %v1297 = vrot.slane %v1296, 1
    %v1298 = vadd.f32 %v1296, %v1297
    %v1299 = vmul.f32 %v1280, %v1262
    %v1300 = vmul.f32 %v1286, %v1262
    %v1301 = vmul.f32 %v1292, %v1262
    %v1302 = vmul.f32 %v1298, %v1262
    %v1303 = vadd.f32 %v1299, 1e-05
    %v1304 = vadd.f32 %v1300, 1e-05
    %v1305 = vadd.f32 %v1301, 1e-05
    %v1306 = vadd.f32 %v1302, 1e-05
    %v1307 = vrsqrt.pop %v1303
    %v1308 = vmul.f32 %v1307, %v1303
    %v1309 = vmul.f32 %v1308, %v1307
    %v1310 = vmul.f32 0.5, %v1309
    %v1311 = vsub.f32 1.5, %v1310
    %v1312 = vmul.f32 %v1307, %v1311
    %vm1313 = vweird.f32 %v1303
    %vm1314 = vweird.f32 %v1307
    %vm1315 = vmor %vm1313, %vm1314
    %v1316 = vsel %vm1315, %v1307, %v1312
    %v1317 = vrsqrt.pop %v1304
    %v1318 = vmul.f32 %v1317, %v1304
    %v1319 = vmul.f32 %v1318, %v1317
    %v1320 = vmul.f32 0.5, %v1319
    %v1321 = vsub.f32 1.5, %v1320
    %v1322 = vmul.f32 %v1317, %v1321
    %vm1323 = vweird.f32 %v1304
    %vm1324 = vweird.f32 %v1317
    %vm1325 = vmor %vm1323, %vm1324
    %v1326 = vsel %vm1325, %v1317, %v1322
    %v1327 = vrsqrt.pop %v1305
    %v1328 = vmul.f32 %v1327, %v1305
    %v1329 = vmul.f32 %v1328, %v1327
    %v1330 = vmul.f32 0.5, %v1329
    %v1331 = vsub.f32 1.5, %v1330
    %v1332 = vmul.f32 %v1327, %v1331
    %vm1333 = vweird.f32 %v1305
    %vm1334 = vweird.f32 %v1327
    %vm1335 = vmor %vm1333, %vm1334
    %v1336 = vsel %vm1335, %v1327, %v1332
    %v1337 = vrsqrt.pop %v1306
    %v1338 = vmul.f32 %v1337, %v1306
    %v1339 = vmul.f32 %v1338, %v1337
    %v1340 = vmul.f32 0.5, %v1339
    %v1341 = vsub.f32 1.5, %v1340
    %v1342 = vmul.f32 %v1337, %v1341
    %vm1343 = vweird.f32 %v1306
    %vm1344 = vweird.f32 %v1337
    %vm1345 = vmor %vm1343, %vm1344
    %v1346 = vsel %vm1345, %v1337, %v1342
    %v1351 = vrot.slane %v1326, 7
    %v1352 = vrot.slane %v1336, 6
    %v1353 = vrot.slane %v1346, 5
    %vm1354 = vcmask 1040384
    %v1355 = vsel %vm1354, %v1316, %v1351
    %vm1356 = vcmask 1042434
    %v1357 = vsel %vm1356, %v1352, %v1353
    %vm1358 = vcmask 1041408
    %v1359 = vsel %vm1358, %v1355, %v1357
    %v1361 = vmul.f32 %v98, %v1359
    %v1363 = vperm.slane %v1361, 0
    %v1364 = vperm.slane %v1361, 1
    %v1365 = vperm.slane %v1361, 2
    %v1366 = vperm.slane %v1361, 3
    %v1371 = vmul.f32 %v1263, %v1363
    %v1372 = vmul.f32 %v1264, %v1364
    %v1373 = vmul.f32 %v1265, %v1365
    %v1374 = vmul.f32 %v1266, %v1366
    %v1379 = vrot.slane %v1372, 7
    %v1380 = vrot.slane %v1373, 6
    %v1381 = vrot.slane %v1374, 5
    %v1382 = vsel %vm1354, %v1371, %v1379
    %v1383 = vsel %vm1356, %v1380, %v1381
    %v1384 = vsel %vm1358, %v1382, %v1383
    %v1386 = vsub.f32 %v99, %v1384
    %v1387 = vmul.f32 %v1228, %v1363
    %v1388 = vmul.f32 %v1229, %v1364
    %v1389 = vmul.f32 %v1230, %v1365
    %v1390 = vmul.f32 %v1231, %v1366
    %v1392 = vperm.slane %v1386, 0
    %v1393 = vperm.slane %v1386, 1
    %v1394 = vperm.slane %v1386, 2
    %v1395 = vperm.slane %v1386, 3
    %v1400 = vadd.f32 %v1387, %v1392
    %v1401 = vadd.f32 %v1388, %v1393
    %v1402 = vadd.f32 %v1389, %v1394
    %v1403 = vadd.f32 %v1390, %v1395
    %v1404 = vmul.f32 %v1400, 0.2
    %v1405 = vmul.f32 %v1401, 0.2
    %v1406 = vmul.f32 %v1402, 0.2
    %v1407 = vmul.f32 %v1403, 0.2
    %v1408 = vmax.f32 %v1400, %v1404
    %v1409 = vmax.f32 %v1401, %v1405
    %v1410 = vmax.f32 %v1402, %v1406
    %v1411 = vmax.f32 %v1403, %v1407
    %v1412 = vpack.c.bf16 %v1408, %v1408
    %v1413 = vpack.c.bf16 %v1409, %v1409
    %v1414 = vpack.c.bf16 %v1410, %v1410
    %v1415 = vpack.c.bf16 %v1411, %v1411
    %v1416 = vld [vmem:[#allocation8] sm:$0xff]
    %v1417 = vld [vmem:[#allocation8 + $0x8] sm:$0xff]
    %v1418 = vld [vmem:[#allocation8 + $0x10] sm:$0xff]
    %v1419 = vld [vmem:[#allocation8 + $0x18] sm:$0xff]
    %v1420 = vld [vmem:[#allocation8 + $0x20] sm:$0xff]
    %v1421 = vld [vmem:[#allocation8 + $0x28] sm:$0xff]
    %v1422 = vld [vmem:[#allocation8 + $0x30] sm:$0xff]
    %v1423 = vld [vmem:[#allocation8 + $0x38] sm:$0xff]
    %v1424 = vld [vmem:[#allocation8 + $0x40] sm:$0xff]
    %v1425 = vld [vmem:[#allocation8 + $0x48] sm:$0xff]
    %v1426 = vld [vmem:[#allocation8 + $0x50] sm:$0xff]
    %v1427 = vld [vmem:[#allocation8 + $0x58] sm:$0xff]
    %v1428 = vld [vmem:[#allocation8 + $0x60] sm:$0xff]
    %v1429 = vld [vmem:[#allocation8 + $0x68] sm:$0xff]
    %v1430 = vld [vmem:[#allocation8 + $0x70] sm:$0xff]
    %v1431 = vld [vmem:[#allocation8 + $0x78] sm:$0xff]
    %v1432 = vld [vmem:[#allocation8 + $0x80] sm:$0xff]
    %v1433 = vld [vmem:[#allocation8 + $0x88] sm:$0xff]
    %v1434 = vld [vmem:[#allocation8 + $0x90] sm:$0xff]
    %v1435 = vld [vmem:[#allocation8 + $0x98] sm:$0xff]
    %v1436 = vld [vmem:[#allocation8 + $0xa0] sm:$0xff]
    %v1437 = vld [vmem:[#allocation8 + $0xa8] sm:$0xff]
    %v1438 = vld [vmem:[#allocation8 + $0xb0] sm:$0xff]
    %v1439 = vld [vmem:[#allocation8 + $0xb8] sm:$0xff]
    %v1440 = vld [vmem:[#allocation8 + $0xc0] sm:$0xff]
    %v1441 = vld [vmem:[#allocation8 + $0xc8] sm:$0xff]
    %v1442 = vld [vmem:[#allocation8 + $0xd0] sm:$0xff]
    %v1443 = vld [vmem:[#allocation8 + $0xd8] sm:$0xff]
    %v1444 = vld [vmem:[#allocation8 + $0xe0] sm:$0xff]
    %v1445 = vld [vmem:[#allocation8 + $0xe8] sm:$0xff]
    %v1446 = vld [vmem:[#allocation8 + $0xf0] sm:$0xff]
    %v1447 = vld [vmem:[#allocation8 + $0xf8] sm:$0xff]
    %v1448 = vld [vmem:[#allocation8 + $0x100] sm:$0xff]
    %v1449 = vld [vmem:[#allocation8 + $0x108] sm:$0xff]
    %v1450 = vld [vmem:[#allocation8 + $0x110] sm:$0xff]
    %v1451 = vld [vmem:[#allocation8 + $0x118] sm:$0xff]
    %v1452 = vld [vmem:[#allocation8 + $0x120] sm:$0xff]
    %v1453 = vld [vmem:[#allocation8 + $0x128] sm:$0xff]
    %v1454 = vld [vmem:[#allocation8 + $0x130] sm:$0xff]
    %v1455 = vld [vmem:[#allocation8 + $0x138] sm:$0xff]
    %v1456 = vld [vmem:[#allocation8 + $0x140] sm:$0xff]
    %v1457 = vld [vmem:[#allocation8 + $0x148] sm:$0xff]
    %v1458 = vld [vmem:[#allocation8 + $0x150] sm:$0xff]
    %v1459 = vld [vmem:[#allocation8 + $0x158] sm:$0xff]
    %v1460 = vld [vmem:[#allocation8 + $0x160] sm:$0xff]
    %v1461 = vld [vmem:[#allocation8 + $0x168] sm:$0xff]
    %v1462 = vld [vmem:[#allocation8 + $0x170] sm:$0xff]
    %v1463 = vld [vmem:[#allocation8 + $0x178] sm:$0xff]
    %v1464 = vld [vmem:[#allocation8 + $0x180] sm:$0xff]
    %v1465 = vld [vmem:[#allocation8 + $0x188] sm:$0xff]
    %v1466 = vld [vmem:[#allocation8 + $0x190] sm:$0xff]
    %v1467 = vld [vmem:[#allocation8 + $0x198] sm:$0xff]
    %v1468 = vld [vmem:[#allocation8 + $0x1a0] sm:$0xff]
    %v1469 = vld [vmem:[#allocation8 + $0x1a8] sm:$0xff]
    %v1470 = vld [vmem:[#allocation8 + $0x1b0] sm:$0xff]
    %v1471 = vld [vmem:[#allocation8 + $0x1b8] sm:$0xff]
    %v1472 = vld [vmem:[#allocation8 + $0x1c0] sm:$0xff]
    %v1473 = vld [vmem:[#allocation8 + $0x1c8] sm:$0xff]
    %v1474 = vld [vmem:[#allocation8 + $0x1d0] sm:$0xff]
    %v1475 = vld [vmem:[#allocation8 + $0x1d8] sm:$0xff]
    %v1476 = vld [vmem:[#allocation8 + $0x1e0] sm:$0xff]
    %v1477 = vld [vmem:[#allocation8 + $0x1e8] sm:$0xff]
    %v1478 = vld [vmem:[#allocation8 + $0x1f0] sm:$0xff]
    %v1479 = vld [vmem:[#allocation8 + $0x1f8] sm:$0xff]
    %v1480 = vld [vmem:[#allocation8 + $0x200] sm:$0xff]
    %v1481 = vld [vmem:[#allocation8 + $0x208] sm:$0xff]
    %v1482 = vld [vmem:[#allocation8 + $0x210] sm:$0xff]
    %v1483 = vld [vmem:[#allocation8 + $0x218] sm:$0xff]
    %v1484 = vld [vmem:[#allocation8 + $0x220] sm:$0xff]
    %v1485 = vld [vmem:[#allocation8 + $0x228] sm:$0xff]
    %v1486 = vld [vmem:[#allocation8 + $0x230] sm:$0xff]
    %v1487 = vld [vmem:[#allocation8 + $0x238] sm:$0xff]
    %v1488 = vld [vmem:[#allocation8 + $0x240] sm:$0xff]
    %v1489 = vld [vmem:[#allocation8 + $0x248] sm:$0xff]
    %v1490 = vld [vmem:[#allocation8 + $0x250] sm:$0xff]
    %v1491 = vld [vmem:[#allocation8 + $0x258] sm:$0xff]
    %v1492 = vld [vmem:[#allocation8 + $0x260] sm:$0xff]
    %v1493 = vld [vmem:[#allocation8 + $0x268] sm:$0xff]
    %v1494 = vld [vmem:[#allocation8 + $0x270] sm:$0xff]
    %v1495 = vld [vmem:[#allocation8 + $0x278] sm:$0xff]
    %v1496 = vld [vmem:[#allocation8 + $0x280] sm:$0xff]
    %v1497 = vld [vmem:[#allocation8 + $0x288] sm:$0xff]
    %v1498 = vld [vmem:[#allocation8 + $0x290] sm:$0xff]
    %v1499 = vld [vmem:[#allocation8 + $0x298] sm:$0xff]
    %v1500 = vld [vmem:[#allocation8 + $0x2a0] sm:$0xff]
    %v1501 = vld [vmem:[#allocation8 + $0x2a8] sm:$0xff]
    %v1502 = vld [vmem:[#allocation8 + $0x2b0] sm:$0xff]
    %v1503 = vld [vmem:[#allocation8 + $0x2b8] sm:$0xff]
    %v1504 = vld [vmem:[#allocation8 + $0x2c0] sm:$0xff]
    %v1505 = vld [vmem:[#allocation8 + $0x2c8] sm:$0xff]
    %v1506 = vld [vmem:[#allocation8 + $0x2d0] sm:$0xff]
    %v1507 = vld [vmem:[#allocation8 + $0x2d8] sm:$0xff]
    %v1508 = vld [vmem:[#allocation8 + $0x2e0] sm:$0xff]
    %v1509 = vld [vmem:[#allocation8 + $0x2e8] sm:$0xff]
    %v1510 = vld [vmem:[#allocation8 + $0x2f0] sm:$0xff]
    %v1511 = vld [vmem:[#allocation8 + $0x2f8] sm:$0xff]
    %v1512 = vld [vmem:[#allocation8 + $0x300] sm:$0xff]
    %v1513 = vld [vmem:[#allocation8 + $0x308] sm:$0xff]
    %v1514 = vld [vmem:[#allocation8 + $0x310] sm:$0xff]
    %v1515 = vld [vmem:[#allocation8 + $0x318] sm:$0xff]
    %v1516 = vld [vmem:[#allocation8 + $0x320] sm:$0xff]
    %v1517 = vld [vmem:[#allocation8 + $0x328] sm:$0xff]
    %v1518 = vld [vmem:[#allocation8 + $0x330] sm:$0xff]
    %v1519 = vld [vmem:[#allocation8 + $0x338] sm:$0xff]
    %v1520 = vld [vmem:[#allocation8 + $0x340] sm:$0xff]
    %v1521 = vld [vmem:[#allocation8 + $0x348] sm:$0xff]
    %v1522 = vld [vmem:[#allocation8 + $0x350] sm:$0xff]
    %v1523 = vld [vmem:[#allocation8 + $0x358] sm:$0xff]
    %v1524 = vld [vmem:[#allocation8 + $0x360] sm:$0xff]
    %v1525 = vld [vmem:[#allocation8 + $0x368] sm:$0xff]
    %v1526 = vld [vmem:[#allocation8 + $0x370] sm:$0xff]
    %v1527 = vld [vmem:[#allocation8 + $0x378] sm:$0xff]
    %v1528 = vld [vmem:[#allocation8 + $0x380] sm:$0xff]
    %v1529 = vld [vmem:[#allocation8 + $0x388] sm:$0xff]
    %v1530 = vld [vmem:[#allocation8 + $0x390] sm:$0xff]
    %v1531 = vld [vmem:[#allocation8 + $0x398] sm:$0xff]
    %v1532 = vld [vmem:[#allocation8 + $0x3a0] sm:$0xff]
    %v1533 = vld [vmem:[#allocation8 + $0x3a8] sm:$0xff]
    %v1534 = vld [vmem:[#allocation8 + $0x3b0] sm:$0xff]
    %v1535 = vld [vmem:[#allocation8 + $0x3b8] sm:$0xff]
    %v1536 = vld [vmem:[#allocation8 + $0x3c0] sm:$0xff]
    %v1537 = vld [vmem:[#allocation8 + $0x3c8] sm:$0xff]
    %v1538 = vld [vmem:[#allocation8 + $0x3d0] sm:$0xff]
    %v1539 = vld [vmem:[#allocation8 + $0x3d8] sm:$0xff]
    %v1540 = vld [vmem:[#allocation8 + $0x3e0] sm:$0xff]
    %v1541 = vld [vmem:[#allocation8 + $0x3e8] sm:$0xff]
    %v1542 = vld [vmem:[#allocation8 + $0x3f0] sm:$0xff]
    %v1543 = vld [vmem:[#allocation8 + $0x3f8] sm:$0xff]
    %v1544 = vld [vmem:[#allocation8 + $0x400] sm:$0xff]
    %v1545 = vld [vmem:[#allocation8 + $0x408] sm:$0xff]
    %v1546 = vld [vmem:[#allocation8 + $0x410] sm:$0xff]
    %v1547 = vld [vmem:[#allocation8 + $0x418] sm:$0xff]
    %v1548 = vld [vmem:[#allocation8 + $0x420] sm:$0xff]
    %v1549 = vld [vmem:[#allocation8 + $0x428] sm:$0xff]
    %v1550 = vld [vmem:[#allocation8 + $0x430] sm:$0xff]
    %v1551 = vld [vmem:[#allocation8 + $0x438] sm:$0xff]
    %v1552 = vld [vmem:[#allocation8 + $0x440] sm:$0xff]
    %v1553 = vld [vmem:[#allocation8 + $0x448] sm:$0xff]
    %v1554 = vld [vmem:[#allocation8 + $0x450] sm:$0xff]
    %v1555 = vld [vmem:[#allocation8 + $0x458] sm:$0xff]
    %v1556 = vld [vmem:[#allocation8 + $0x460] sm:$0xff]
    %v1557 = vld [vmem:[#allocation8 + $0x468] sm:$0xff]
    %v1558 = vld [vmem:[#allocation8 + $0x470] sm:$0xff]
    %v1559 = vld [vmem:[#allocation8 + $0x478] sm:$0xff]
    %v1560 = vld [vmem:[#allocation8 + $0x480] sm:$0xff]
    %v1561 = vld [vmem:[#allocation8 + $0x488] sm:$0xff]
    %v1562 = vld [vmem:[#allocation8 + $0x490] sm:$0xff]
    %v1563 = vld [vmem:[#allocation8 + $0x498] sm:$0xff]
    %v1564 = vld [vmem:[#allocation8 + $0x4a0] sm:$0xff]
    %v1565 = vld [vmem:[#allocation8 + $0x4a8] sm:$0xff]
    %v1566 = vld [vmem:[#allocation8 + $0x4b0] sm:$0xff]
    %v1567 = vld [vmem:[#allocation8 + $0x4b8] sm:$0xff]
    %v1568 = vld [vmem:[#allocation8 + $0x4c0] sm:$0xff]
    %v1569 = vld [vmem:[#allocation8 + $0x4c8] sm:$0xff]
    %v1570 = vld [vmem:[#allocation8 + $0x4d0] sm:$0xff]
    %v1571 = vld [vmem:[#allocation8 + $0x4d8] sm:$0xff]
    %v1572 = vld [vmem:[#allocation8 + $0x4e0] sm:$0xff]
    %v1573 = vld [vmem:[#allocation8 + $0x4e8] sm:$0xff]
    %v1574 = vld [vmem:[#allocation8 + $0x4f0] sm:$0xff]
    %v1575 = vld [vmem:[#allocation8 + $0x4f8] sm:$0xff]
    %v1576 = vld [vmem:[#allocation8 + $0x500] sm:$0xff]
    %v1577 = vld [vmem:[#allocation8 + $0x508] sm:$0xff]
    %v1578 = vld [vmem:[#allocation8 + $0x510] sm:$0xff]
    %v1579 = vld [vmem:[#allocation8 + $0x518] sm:$0xff]
    %v1580 = vld [vmem:[#allocation8 + $0x520] sm:$0xff]
    %v1581 = vld [vmem:[#allocation8 + $0x528] sm:$0xff]
    %v1582 = vld [vmem:[#allocation8 + $0x530] sm:$0xff]
    %v1583 = vld [vmem:[#allocation8 + $0x538] sm:$0xff]
    %v1584 = vld [vmem:[#allocation8 + $0x540] sm:$0xff]
    %v1585 = vld [vmem:[#allocation8 + $0x548] sm:$0xff]
    %v1586 = vld [vmem:[#allocation8 + $0x550] sm:$0xff]
    %v1587 = vld [vmem:[#allocation8 + $0x558] sm:$0xff]
    %v1588 = vld [vmem:[#allocation8 + $0x560] sm:$0xff]
    %v1589 = vld [vmem:[#allocation8 + $0x568] sm:$0xff]
    %v1590 = vld [vmem:[#allocation8 + $0x570] sm:$0xff]
    %v1591 = vld [vmem:[#allocation8 + $0x578] sm:$0xff]
    %v1592 = vld [vmem:[#allocation8 + $0x580] sm:$0xff]
    %v1593 = vld [vmem:[#allocation8 + $0x588] sm:$0xff]
    %v1594 = vld [vmem:[#allocation8 + $0x590] sm:$0xff]
    %v1595 = vld [vmem:[#allocation8 + $0x598] sm:$0xff]
    %v1596 = vld [vmem:[#allocation8 + $0x5a0] sm:$0xff]
    %v1597 = vld [vmem:[#allocation8 + $0x5a8] sm:$0xff]
    %v1598 = vld [vmem:[#allocation8 + $0x5b0] sm:$0xff]
    %v1599 = vld [vmem:[#allocation8 + $0x5b8] sm:$0xff]
    %v1600 = vld [vmem:[#allocation8 + $0x5c0] sm:$0xff]
    %v1601 = vld [vmem:[#allocation8 + $0x5c8] sm:$0xff]
    %v1602 = vld [vmem:[#allocation8 + $0x5d0] sm:$0xff]
    %v1603 = vld [vmem:[#allocation8 + $0x5d8] sm:$0xff]
    %v1604 = vld [vmem:[#allocation8 + $0x5e0] sm:$0xff]
    %v1605 = vld [vmem:[#allocation8 + $0x5e8] sm:$0xff]
    %v1606 = vld [vmem:[#allocation8 + $0x5f0] sm:$0xff]
    %v1607 = vld [vmem:[#allocation8 + $0x5f8] sm:$0xff]
    %v1608 = vld [vmem:[#allocation8 + $0x600] sm:$0xff]
    %v1609 = vld [vmem:[#allocation8 + $0x608] sm:$0xff]
    %v1610 = vld [vmem:[#allocation8 + $0x610] sm:$0xff]
    %v1611 = vld [vmem:[#allocation8 + $0x618] sm:$0xff]
    %v1612 = vld [vmem:[#allocation8 + $0x620] sm:$0xff]
    %v1613 = vld [vmem:[#allocation8 + $0x628] sm:$0xff]
    %v1614 = vld [vmem:[#allocation8 + $0x630] sm:$0xff]
    %v1615 = vld [vmem:[#allocation8 + $0x638] sm:$0xff]
    %v1616 = vld [vmem:[#allocation8 + $0x640] sm:$0xff]
    %v1617 = vld [vmem:[#allocation8 + $0x648] sm:$0xff]
    %v1618 = vld [vmem:[#allocation8 + $0x650] sm:$0xff]
    %v1619 = vld [vmem:[#allocation8 + $0x658] sm:$0xff]
    %v1620 = vld [vmem:[#allocation8 + $0x660] sm:$0xff]
    %v1621 = vld [vmem:[#allocation8 + $0x668] sm:$0xff]
    %v1622 = vld [vmem:[#allocation8 + $0x670] sm:$0xff]
    %v1623 = vld [vmem:[#allocation8 + $0x678] sm:$0xff]
    %v1624 = vld [vmem:[#allocation8 + $0x680] sm:$0xff]
    %v1625 = vld [vmem:[#allocation8 + $0x688] sm:$0xff]
    %v1626 = vld [vmem:[#allocation8 + $0x690] sm:$0xff]
    %v1627 = vld [vmem:[#allocation8 + $0x698] sm:$0xff]
    %v1628 = vld [vmem:[#allocation8 + $0x6a0] sm:$0xff]
    %v1629 = vld [vmem:[#allocation8 + $0x6a8] sm:$0xff]
    %v1630 = vld [vmem:[#allocation8 + $0x6b0] sm:$0xff]
    %v1631 = vld [vmem:[#allocation8 + $0x6b8] sm:$0xff]
    %v1632 = vld [vmem:[#allocation8 + $0x6c0] sm:$0xff]
    %v1633 = vld [vmem:[#allocation8 + $0x6c8] sm:$0xff]
    %v1634 = vld [vmem:[#allocation8 + $0x6d0] sm:$0xff]
    %v1635 = vld [vmem:[#allocation8 + $0x6d8] sm:$0xff]
    %v1636 = vld [vmem:[#allocation8 + $0x6e0] sm:$0xff]
    %v1637 = vld [vmem:[#allocation8 + $0x6e8] sm:$0xff]
    %v1638 = vld [vmem:[#allocation8 + $0x6f0] sm:$0xff]
    %v1639 = vld [vmem:[#allocation8 + $0x6f8] sm:$0xff]
    %v1640 = vld [vmem:[#allocation8 + $0x700] sm:$0xff]
    %v1641 = vld [vmem:[#allocation8 + $0x708] sm:$0xff]
    %v1642 = vld [vmem:[#allocation8 + $0x710] sm:$0xff]
    %v1643 = vld [vmem:[#allocation8 + $0x718] sm:$0xff]
    %v1644 = vld [vmem:[#allocation8 + $0x720] sm:$0xff]
    %v1645 = vld [vmem:[#allocation8 + $0x728] sm:$0xff]
    %v1646 = vld [vmem:[#allocation8 + $0x730] sm:$0xff]
    %v1647 = vld [vmem:[#allocation8 + $0x738] sm:$0xff]
    %v1648 = vld [vmem:[#allocation8 + $0x740] sm:$0xff]
    %v1649 = vld [vmem:[#allocation8 + $0x748] sm:$0xff]
    %v1650 = vld [vmem:[#allocation8 + $0x750] sm:$0xff]
    %v1651 = vld [vmem:[#allocation8 + $0x758] sm:$0xff]
    %v1652 = vld [vmem:[#allocation8 + $0x760] sm:$0xff]
    %v1653 = vld [vmem:[#allocation8 + $0x768] sm:$0xff]
    %v1654 = vld [vmem:[#allocation8 + $0x770] sm:$0xff]
    %v1655 = vld [vmem:[#allocation8 + $0x778] sm:$0xff]
    %v1656 = vld [vmem:[#allocation8 + $0x780] sm:$0xff]
    %v1657 = vld [vmem:[#allocation8 + $0x788] sm:$0xff]
    %v1658 = vld [vmem:[#allocation8 + $0x790] sm:$0xff]
    %v1659 = vld [vmem:[#allocation8 + $0x798] sm:$0xff]
    %v1660 = vld [vmem:[#allocation8 + $0x7a0] sm:$0xff]
    %v1661 = vld [vmem:[#allocation8 + $0x7a8] sm:$0xff]
    %v1662 = vld [vmem:[#allocation8 + $0x7b0] sm:$0xff]
    %v1663 = vld [vmem:[#allocation8 + $0x7b8] sm:$0xff]
    %v1664 = vld [vmem:[#allocation8 + $0x7c0] sm:$0xff]
    %v1665 = vld [vmem:[#allocation8 + $0x7c8] sm:$0xff]
    %v1666 = vld [vmem:[#allocation8 + $0x7d0] sm:$0xff]
    %v1667 = vld [vmem:[#allocation8 + $0x7d8] sm:$0xff]
    %v1668 = vld [vmem:[#allocation8 + $0x7e0] sm:$0xff]
    %v1669 = vld [vmem:[#allocation8 + $0x7e8] sm:$0xff]
    %v1670 = vld [vmem:[#allocation8 + $0x7f0] sm:$0xff]
    %v1671 = vld [vmem:[#allocation8 + $0x7f8] sm:$0xff]
    %v1928 = vunpack.c.l.b16 %v1416
    %v1929 = vunpack.c.h.b16 %v1416
    %v1930 = vunpack.c.l.b16 %v1417
    %v1931 = vunpack.c.h.b16 %v1417
    %v1932 = vunpack.c.l.b16 %v1418
    %v1933 = vunpack.c.h.b16 %v1418
    %v1934 = vunpack.c.l.b16 %v1419
    %v1935 = vunpack.c.h.b16 %v1419
    %v1936 = vunpack.c.l.b16 %v1420
    %v1937 = vunpack.c.h.b16 %v1420
    %v1938 = vunpack.c.l.b16 %v1421
    %v1939 = vunpack.c.h.b16 %v1421
    %v1940 = vunpack.c.l.b16 %v1422
    %v1941 = vunpack.c.h.b16 %v1422
    %v1942 = vunpack.c.l.b16 %v1423
    %v1943 = vunpack.c.h.b16 %v1423
    %v1944 = vunpack.c.l.b16 %v1424
    %v1945 = vunpack.c.h.b16 %v1424
    %v1946 = vunpack.c.l.b16 %v1425
    %v1947 = vunpack.c.h.b16 %v1425
    %v1948 = vunpack.c.l.b16 %v1426
    %v1949 = vunpack.c.h.b16 %v1426
    %v1950 = vunpack.c.l.b16 %v1427
    %v1951 = vunpack.c.h.b16 %v1427
    %v1952 = vunpack.c.l.b16 %v1428
    %v1953 = vunpack.c.h.b16 %v1428
    %v1954 = vunpack.c.l.b16 %v1429
    %v1955 = vunpack.c.h.b16 %v1429
    %v1956 = vunpack.c.l.b16 %v1430
    %v1957 = vunpack.c.h.b16 %v1430
    %v1958 = vunpack.c.l.b16 %v1431
    %v1959 = vunpack.c.h.b16 %v1431
    %v1960 = vunpack.c.l.b16 %v1432
    %v1961 = vunpack.c.h.b16 %v1432
    %v1962 = vunpack.c.l.b16 %v1433
    %v1963 = vunpack.c.h.b16 %v1433
    %v1964 = vunpack.c.l.b16 %v1434
    %v1965 = vunpack.c.h.b16 %v1434
    %v1966 = vunpack.c.l.b16 %v1435
    %v1967 = vunpack.c.h.b16 %v1435
    %v1968 = vunpack.c.l.b16 %v1436
    %v1969 = vunpack.c.h.b16 %v1436
    %v1970 = vunpack.c.l.b16 %v1437
    %v1971 = vunpack.c.h.b16 %v1437
    %v1972 = vunpack.c.l.b16 %v1438
    %v1973 = vunpack.c.h.b16 %v1438
    %v1974 = vunpack.c.l.b16 %v1439
    %v1975 = vunpack.c.h.b16 %v1439
    %v1976 = vunpack.c.l.b16 %v1440
    %v1977 = vunpack.c.h.b16 %v1440
    %v1978 = vunpack.c.l.b16 %v1441
    %v1979 = vunpack.c.h.b16 %v1441
    %v1980 = vunpack.c.l.b16 %v1442
    %v1981 = vunpack.c.h.b16 %v1442
    %v1982 = vunpack.c.l.b16 %v1443
    %v1983 = vunpack.c.h.b16 %v1443
    %v1984 = vunpack.c.l.b16 %v1444
    %v1985 = vunpack.c.h.b16 %v1444
    %v1986 = vunpack.c.l.b16 %v1445
    %v1987 = vunpack.c.h.b16 %v1445
    %v1988 = vunpack.c.l.b16 %v1446
    %v1989 = vunpack.c.h.b16 %v1446
    %v1990 = vunpack.c.l.b16 %v1447
    %v1991 = vunpack.c.h.b16 %v1447
    %v1992 = vunpack.c.l.b16 %v1448
    %v1993 = vunpack.c.h.b16 %v1448
    %v1994 = vunpack.c.l.b16 %v1449
    %v1995 = vunpack.c.h.b16 %v1449
    %v1996 = vunpack.c.l.b16 %v1450
    %v1997 = vunpack.c.h.b16 %v1450
    %v1998 = vunpack.c.l.b16 %v1451
    %v1999 = vunpack.c.h.b16 %v1451
    %v2000 = vunpack.c.l.b16 %v1452
    %v2001 = vunpack.c.h.b16 %v1452
    %v2002 = vunpack.c.l.b16 %v1453
    %v2003 = vunpack.c.h.b16 %v1453
    %v2004 = vunpack.c.l.b16 %v1454
    %v2005 = vunpack.c.h.b16 %v1454
    %v2006 = vunpack.c.l.b16 %v1455
    %v2007 = vunpack.c.h.b16 %v1455
    %v2008 = vunpack.c.l.b16 %v1456
    %v2009 = vunpack.c.h.b16 %v1456
    %v2010 = vunpack.c.l.b16 %v1457
    %v2011 = vunpack.c.h.b16 %v1457
    %v2012 = vunpack.c.l.b16 %v1458
    %v2013 = vunpack.c.h.b16 %v1458
    %v2014 = vunpack.c.l.b16 %v1459
    %v2015 = vunpack.c.h.b16 %v1459
    %v2016 = vunpack.c.l.b16 %v1460
    %v2017 = vunpack.c.h.b16 %v1460
    %v2018 = vunpack.c.l.b16 %v1461
    %v2019 = vunpack.c.h.b16 %v1461
    %v2020 = vunpack.c.l.b16 %v1462
    %v2021 = vunpack.c.h.b16 %v1462
    %v2022 = vunpack.c.l.b16 %v1463
    %v2023 = vunpack.c.h.b16 %v1463
    %v2024 = vunpack.c.l.b16 %v1464
    %v2025 = vunpack.c.h.b16 %v1464
    %v2026 = vunpack.c.l.b16 %v1465
    %v2027 = vunpack.c.h.b16 %v1465
    %v2028 = vunpack.c.l.b16 %v1466
    %v2029 = vunpack.c.h.b16 %v1466
    %v2030 = vunpack.c.l.b16 %v1467
    %v2031 = vunpack.c.h.b16 %v1467
    %v2032 = vunpack.c.l.b16 %v1468
    %v2033 = vunpack.c.h.b16 %v1468
    %v2034 = vunpack.c.l.b16 %v1469
    %v2035 = vunpack.c.h.b16 %v1469
    %v2036 = vunpack.c.l.b16 %v1470
    %v2037 = vunpack.c.h.b16 %v1470
    %v2038 = vunpack.c.l.b16 %v1471
    %v2039 = vunpack.c.h.b16 %v1471
    %v2040 = vunpack.c.l.b16 %v1472
    %v2041 = vunpack.c.h.b16 %v1472
    %v2042 = vunpack.c.l.b16 %v1473
    %v2043 = vunpack.c.h.b16 %v1473
    %v2044 = vunpack.c.l.b16 %v1474
    %v2045 = vunpack.c.h.b16 %v1474
    %v2046 = vunpack.c.l.b16 %v1475
    %v2047 = vunpack.c.h.b16 %v1475
    %v2048 = vunpack.c.l.b16 %v1476
    %v2049 = vunpack.c.h.b16 %v1476
    %v2050 = vunpack.c.l.b16 %v1477
    %v2051 = vunpack.c.h.b16 %v1477
    %v2052 = vunpack.c.l.b16 %v1478
    %v2053 = vunpack.c.h.b16 %v1478
    %v2054 = vunpack.c.l.b16 %v1479
    %v2055 = vunpack.c.h.b16 %v1479
    %v2056 = vunpack.c.l.b16 %v1480
    %v2057 = vunpack.c.h.b16 %v1480
    %v2058 = vunpack.c.l.b16 %v1481
    %v2059 = vunpack.c.h.b16 %v1481
    %v2060 = vunpack.c.l.b16 %v1482
    %v2061 = vunpack.c.h.b16 %v1482
    %v2062 = vunpack.c.l.b16 %v1483
    %v2063 = vunpack.c.h.b16 %v1483
    %v2064 = vunpack.c.l.b16 %v1484
    %v2065 = vunpack.c.h.b16 %v1484
    %v2066 = vunpack.c.l.b16 %v1485
    %v2067 = vunpack.c.h.b16 %v1485
    %v2068 = vunpack.c.l.b16 %v1486
    %v2069 = vunpack.c.h.b16 %v1486
    %v2070 = vunpack.c.l.b16 %v1487
    %v2071 = vunpack.c.h.b16 %v1487
    %v2072 = vunpack.c.l.b16 %v1488
    %v2073 = vunpack.c.h.b16 %v1488
    %v2074 = vunpack.c.l.b16 %v1489
    %v2075 = vunpack.c.h.b16 %v1489
    %v2076 = vunpack.c.l.b16 %v1490
    %v2077 = vunpack.c.h.b16 %v1490
    %v2078 = vunpack.c.l.b16 %v1491
    %v2079 = vunpack.c.h.b16 %v1491
    %v2080 = vunpack.c.l.b16 %v1492
    %v2081 = vunpack.c.h.b16 %v1492
    %v2082 = vunpack.c.l.b16 %v1493
    %v2083 = vunpack.c.h.b16 %v1493
    %v2084 = vunpack.c.l.b16 %v1494
    %v2085 = vunpack.c.h.b16 %v1494
    %v2086 = vunpack.c.l.b16 %v1495
    %v2087 = vunpack.c.h.b16 %v1495
    %v2088 = vunpack.c.l.b16 %v1496
    %v2089 = vunpack.c.h.b16 %v1496
    %v2090 = vunpack.c.l.b16 %v1497
    %v2091 = vunpack.c.h.b16 %v1497
    %v2092 = vunpack.c.l.b16 %v1498
    %v2093 = vunpack.c.h.b16 %v1498
    %v2094 = vunpack.c.l.b16 %v1499
    %v2095 = vunpack.c.h.b16 %v1499
    %v2096 = vunpack.c.l.b16 %v1500
    %v2097 = vunpack.c.h.b16 %v1500
    %v2098 = vunpack.c.l.b16 %v1501
    %v2099 = vunpack.c.h.b16 %v1501
    %v2100 = vunpack.c.l.b16 %v1502
    %v2101 = vunpack.c.h.b16 %v1502
    %v2102 = vunpack.c.l.b16 %v1503
    %v2103 = vunpack.c.h.b16 %v1503
    %v2104 = vunpack.c.l.b16 %v1504
    %v2105 = vunpack.c.h.b16 %v1504
    %v2106 = vunpack.c.l.b16 %v1505
    %v2107 = vunpack.c.h.b16 %v1505
    %v2108 = vunpack.c.l.b16 %v1506
    %v2109 = vunpack.c.h.b16 %v1506
    %v2110 = vunpack.c.l.b16 %v1507
    %v2111 = vunpack.c.h.b16 %v1507
    %v2112 = vunpack.c.l.b16 %v1508
    %v2113 = vunpack.c.h.b16 %v1508
    %v2114 = vunpack.c.l.b16 %v1509
    %v2115 = vunpack.c.h.b16 %v1509
    %v2116 = vunpack.c.l.b16 %v1510
    %v2117 = vunpack.c.h.b16 %v1510
    %v2118 = vunpack.c.l.b16 %v1511
    %v2119 = vunpack.c.h.b16 %v1511
    %v2120 = vunpack.c.l.b16 %v1512
    %v2121 = vunpack.c.h.b16 %v1512
    %v2122 = vunpack.c.l.b16 %v1513
    %v2123 = vunpack.c.h.b16 %v1513
    %v2124 = vunpack.c.l.b16 %v1514
    %v2125 = vunpack.c.h.b16 %v1514
    %v2126 = vunpack.c.l.b16 %v1515
    %v2127 = vunpack.c.h.b16 %v1515
    %v2128 = vunpack.c.l.b16 %v1516
    %v2129 = vunpack.c.h.b16 %v1516
    %v2130 = vunpack.c.l.b16 %v1517
    %v2131 = vunpack.c.h.b16 %v1517
    %v2132 = vunpack.c.l.b16 %v1518
    %v2133 = vunpack.c.h.b16 %v1518
    %v2134 = vunpack.c.l.b16 %v1519
    %v2135 = vunpack.c.h.b16 %v1519
    %v2136 = vunpack.c.l.b16 %v1520
    %v2137 = vunpack.c.h.b16 %v1520
    %v2138 = vunpack.c.l.b16 %v1521
    %v2139 = vunpack.c.h.b16 %v1521
    %v2140 = vunpack.c.l.b16 %v1522
    %v2141 = vunpack.c.h.b16 %v1522
    %v2142 = vunpack.c.l.b16 %v1523
    %v2143 = vunpack.c.h.b16 %v1523
    %v2144 = vunpack.c.l.b16 %v1524
    %v2145 = vunpack.c.h.b16 %v1524
    %v2146 = vunpack.c.l.b16 %v1525
    %v2147 = vunpack.c.h.b16 %v1525
    %v2148 = vunpack.c.l.b16 %v1526
    %v2149 = vunpack.c.h.b16 %v1526
    %v2150 = vunpack.c.l.b16 %v1527
    %v2151 = vunpack.c.h.b16 %v1527
    %v2152 = vunpack.c.l.b16 %v1528
    %v2153 = vunpack.c.h.b16 %v1528
    %v2154 = vunpack.c.l.b16 %v1529
    %v2155 = vunpack.c.h.b16 %v1529
    %v2156 = vunpack.c.l.b16 %v1530
    %v2157 = vunpack.c.h.b16 %v1530
    %v2158 = vunpack.c.l.b16 %v1531
    %v2159 = vunpack.c.h.b16 %v1531
    %v2160 = vunpack.c.l.b16 %v1532
    %v2161 = vunpack.c.h.b16 %v1532
    %v2162 = vunpack.c.l.b16 %v1533
    %v2163 = vunpack.c.h.b16 %v1533
    %v2164 = vunpack.c.l.b16 %v1534
    %v2165 = vunpack.c.h.b16 %v1534
    %v2166 = vunpack.c.l.b16 %v1535
    %v2167 = vunpack.c.h.b16 %v1535
    %v2168 = vunpack.c.l.b16 %v1536
    %v2169 = vunpack.c.h.b16 %v1536
    %v2170 = vunpack.c.l.b16 %v1537
    %v2171 = vunpack.c.h.b16 %v1537
    %v2172 = vunpack.c.l.b16 %v1538
    %v2173 = vunpack.c.h.b16 %v1538
    %v2174 = vunpack.c.l.b16 %v1539
    %v2175 = vunpack.c.h.b16 %v1539
    %v2176 = vunpack.c.l.b16 %v1540
    %v2177 = vunpack.c.h.b16 %v1540
    %v2178 = vunpack.c.l.b16 %v1541
    %v2179 = vunpack.c.h.b16 %v1541
    %v2180 = vunpack.c.l.b16 %v1542
    %v2181 = vunpack.c.h.b16 %v1542
    %v2182 = vunpack.c.l.b16 %v1543
    %v2183 = vunpack.c.h.b16 %v1543
    %v2184 = vunpack.c.l.b16 %v1544
    %v2185 = vunpack.c.h.b16 %v1544
    %v2186 = vunpack.c.l.b16 %v1545
    %v2187 = vunpack.c.h.b16 %v1545
    %v2188 = vunpack.c.l.b16 %v1546
    %v2189 = vunpack.c.h.b16 %v1546
    %v2190 = vunpack.c.l.b16 %v1547
    %v2191 = vunpack.c.h.b16 %v1547
    %v2192 = vunpack.c.l.b16 %v1548
    %v2193 = vunpack.c.h.b16 %v1548
    %v2194 = vunpack.c.l.b16 %v1549
    %v2195 = vunpack.c.h.b16 %v1549
    %v2196 = vunpack.c.l.b16 %v1550
    %v2197 = vunpack.c.h.b16 %v1550
    %v2198 = vunpack.c.l.b16 %v1551
    %v2199 = vunpack.c.h.b16 %v1551
    %v2200 = vunpack.c.l.b16 %v1552
    %v2201 = vunpack.c.h.b16 %v1552
    %v2202 = vunpack.c.l.b16 %v1553
    %v2203 = vunpack.c.h.b16 %v1553
    %v2204 = vunpack.c.l.b16 %v1554
    %v2205 = vunpack.c.h.b16 %v1554
    %v2206 = vunpack.c.l.b16 %v1555
    %v2207 = vunpack.c.h.b16 %v1555
    %v2208 = vunpack.c.l.b16 %v1556
    %v2209 = vunpack.c.h.b16 %v1556
    %v2210 = vunpack.c.l.b16 %v1557
    %v2211 = vunpack.c.h.b16 %v1557
    %v2212 = vunpack.c.l.b16 %v1558
    %v2213 = vunpack.c.h.b16 %v1558
    %v2214 = vunpack.c.l.b16 %v1559
    %v2215 = vunpack.c.h.b16 %v1559
    %v2216 = vunpack.c.l.b16 %v1560
    %v2217 = vunpack.c.h.b16 %v1560
    %v2218 = vunpack.c.l.b16 %v1561
    %v2219 = vunpack.c.h.b16 %v1561
    %v2220 = vunpack.c.l.b16 %v1562
    %v2221 = vunpack.c.h.b16 %v1562
    %v2222 = vunpack.c.l.b16 %v1563
    %v2223 = vunpack.c.h.b16 %v1563
    %v2224 = vunpack.c.l.b16 %v1564
    %v2225 = vunpack.c.h.b16 %v1564
    %v2226 = vunpack.c.l.b16 %v1565
    %v2227 = vunpack.c.h.b16 %v1565
    %v2228 = vunpack.c.l.b16 %v1566
    %v2229 = vunpack.c.h.b16 %v1566
    %v2230 = vunpack.c.l.b16 %v1567
    %v2231 = vunpack.c.h.b16 %v1567
    %v2232 = vunpack.c.l.b16 %v1568
    %v2233 = vunpack.c.h.b16 %v1568
    %v2234 = vunpack.c.l.b16 %v1569
    %v2235 = vunpack.c.h.b16 %v1569
    %v2236 = vunpack.c.l.b16 %v1570
    %v2237 = vunpack.c.h.b16 %v1570
    %v2238 = vunpack.c.l.b16 %v1571
    %v2239 = vunpack.c.h.b16 %v1571
    %v2240 = vunpack.c.l.b16 %v1572
    %v2241 = vunpack.c.h.b16 %v1572
    %v2242 = vunpack.c.l.b16 %v1573
    %v2243 = vunpack.c.h.b16 %v1573
    %v2244 = vunpack.c.l.b16 %v1574
    %v2245 = vunpack.c.h.b16 %v1574
    %v2246 = vunpack.c.l.b16 %v1575
    %v2247 = vunpack.c.h.b16 %v1575
    %v2248 = vunpack.c.l.b16 %v1576
    %v2249 = vunpack.c.h.b16 %v1576
    %v2250 = vunpack.c.l.b16 %v1577
    %v2251 = vunpack.c.h.b16 %v1577
    %v2252 = vunpack.c.l.b16 %v1578
    %v2253 = vunpack.c.h.b16 %v1578
    %v2254 = vunpack.c.l.b16 %v1579
    %v2255 = vunpack.c.h.b16 %v1579
    %v2256 = vunpack.c.l.b16 %v1580
    %v2257 = vunpack.c.h.b16 %v1580
    %v2258 = vunpack.c.l.b16 %v1581
    %v2259 = vunpack.c.h.b16 %v1581
    %v2260 = vunpack.c.l.b16 %v1582
    %v2261 = vunpack.c.h.b16 %v1582
    %v2262 = vunpack.c.l.b16 %v1583
    %v2263 = vunpack.c.h.b16 %v1583
    %v2264 = vunpack.c.l.b16 %v1584
    %v2265 = vunpack.c.h.b16 %v1584
    %v2266 = vunpack.c.l.b16 %v1585
    %v2267 = vunpack.c.h.b16 %v1585
    %v2268 = vunpack.c.l.b16 %v1586
    %v2269 = vunpack.c.h.b16 %v1586
    %v2270 = vunpack.c.l.b16 %v1587
    %v2271 = vunpack.c.h.b16 %v1587
    %v2272 = vunpack.c.l.b16 %v1588
    %v2273 = vunpack.c.h.b16 %v1588
    %v2274 = vunpack.c.l.b16 %v1589
    %v2275 = vunpack.c.h.b16 %v1589
    %v2276 = vunpack.c.l.b16 %v1590
    %v2277 = vunpack.c.h.b16 %v1590
    %v2278 = vunpack.c.l.b16 %v1591
    %v2279 = vunpack.c.h.b16 %v1591
    %v2280 = vunpack.c.l.b16 %v1592
    %v2281 = vunpack.c.h.b16 %v1592
    %v2282 = vunpack.c.l.b16 %v1593
    %v2283 = vunpack.c.h.b16 %v1593
    %v2284 = vunpack.c.l.b16 %v1594
    %v2285 = vunpack.c.h.b16 %v1594
    %v2286 = vunpack.c.l.b16 %v1595
    %v2287 = vunpack.c.h.b16 %v1595
    %v2288 = vunpack.c.l.b16 %v1596
    %v2289 = vunpack.c.h.b16 %v1596
    %v2290 = vunpack.c.l.b16 %v1597
    %v2291 = vunpack.c.h.b16 %v1597
    %v2292 = vunpack.c.l.b16 %v1598
    %v2293 = vunpack.c.h.b16 %v1598
    %v2294 = vunpack.c.l.b16 %v1599
    %v2295 = vunpack.c.h.b16 %v1599
    %v2296 = vunpack.c.l.b16 %v1600
    %v2297 = vunpack.c.h.b16 %v1600
    %v2298 = vunpack.c.l.b16 %v1601
    %v2299 = vunpack.c.h.b16 %v1601
    %v2300 = vunpack.c.l.b16 %v1602
    %v2301 = vunpack.c.h.b16 %v1602
    %v2302 = vunpack.c.l.b16 %v1603
    %v2303 = vunpack.c.h.b16 %v1603
    %v2304 = vunpack.c.l.b16 %v1604
    %v2305 = vunpack.c.h.b16 %v1604
    %v2306 = vunpack.c.l.b16 %v1605
    %v2307 = vunpack.c.h.b16 %v1605
    %v2308 = vunpack.c.l.b16 %v1606
    %v2309 = vunpack.c.h.b16 %v1606
    %v2310 = vunpack.c.l.b16 %v1607
    %v2311 = vunpack.c.h.b16 %v1607
    %v2312 = vunpack.c.l.b16 %v1608
    %v2313 = vunpack.c.h.b16 %v1608
    %v2314 = vunpack.c.l.b16 %v1609
    %v2315 = vunpack.c.h.b16 %v1609
    %v2316 = vunpack.c.l.b16 %v1610
    %v2317 = vunpack.c.h.b16 %v1610
    %v2318 = vunpack.c.l.b16 %v1611
    %v2319 = vunpack.c.h.b16 %v1611
    %v2320 = vunpack.c.l.b16 %v1612
    %v2321 = vunpack.c.h.b16 %v1612
    %v2322 = vunpack.c.l.b16 %v1613
    %v2323 = vunpack.c.h.b16 %v1613
    %v2324 = vunpack.c.l.b16 %v1614
    %v2325 = vunpack.c.h.b16 %v1614
    %v2326 = vunpack.c.l.b16 %v1615
    %v2327 = vunpack.c.h.b16 %v1615
    %v2328 = vunpack.c.l.b16 %v1616
    %v2329 = vunpack.c.h.b16 %v1616
    %v2330 = vunpack.c.l.b16 %v1617
    %v2331 = vunpack.c.h.b16 %v1617
    %v2332 = vunpack.c.l.b16 %v1618
    %v2333 = vunpack.c.h.b16 %v1618
    %v2334 = vunpack.c.l.b16 %v1619
    %v2335 = vunpack.c.h.b16 %v1619
    %v2336 = vunpack.c.l.b16 %v1620
    %v2337 = vunpack.c.h.b16 %v1620
    %v2338 = vunpack.c.l.b16 %v1621
    %v2339 = vunpack.c.h.b16 %v1621
    %v2340 = vunpack.c.l.b16 %v1622
    %v2341 = vunpack.c.h.b16 %v1622
    %v2342 = vunpack.c.l.b16 %v1623
    %v2343 = vunpack.c.h.b16 %v1623
    %v2344 = vunpack.c.l.b16 %v1624
    %v2345 = vunpack.c.h.b16 %v1624
    %v2346 = vunpack.c.l.b16 %v1625
    %v2347 = vunpack.c.h.b16 %v1625
    %v2348 = vunpack.c.l.b16 %v1626
    %v2349 = vunpack.c.h.b16 %v1626
    %v2350 = vunpack.c.l.b16 %v1627
    %v2351 = vunpack.c.h.b16 %v1627
    %v2352 = vunpack.c.l.b16 %v1628
    %v2353 = vunpack.c.h.b16 %v1628
    %v2354 = vunpack.c.l.b16 %v1629
    %v2355 = vunpack.c.h.b16 %v1629
    %v2356 = vunpack.c.l.b16 %v1630
    %v2357 = vunpack.c.h.b16 %v1630
    %v2358 = vunpack.c.l.b16 %v1631
    %v2359 = vunpack.c.h.b16 %v1631
    %v2360 = vunpack.c.l.b16 %v1632
    %v2361 = vunpack.c.h.b16 %v1632
    %v2362 = vunpack.c.l.b16 %v1633
    %v2363 = vunpack.c.h.b16 %v1633
    %v2364 = vunpack.c.l.b16 %v1634
    %v2365 = vunpack.c.h.b16 %v1634
    %v2366 = vunpack.c.l.b16 %v1635
    %v2367 = vunpack.c.h.b16 %v1635
    %v2368 = vunpack.c.l.b16 %v1636
    %v2369 = vunpack.c.h.b16 %v1636
    %v2370 = vunpack.c.l.b16 %v1637
    %v2371 = vunpack.c.h.b16 %v1637
    %v2372 = vunpack.c.l.b16 %v1638
    %v2373 = vunpack.c.h.b16 %v1638
    %v2374 = vunpack.c.l.b16 %v1639
    %v2375 = vunpack.c.h.b16 %v1639
    %v2376 = vunpack.c.l.b16 %v1640
    %v2377 = vunpack.c.h.b16 %v1640
    %v2378 = vunpack.c.l.b16 %v1641
    %v2379 = vunpack.c.h.b16 %v1641
    %v2380 = vunpack.c.l.b16 %v1642
    %v2381 = vunpack.c.h.b16 %v1642
    %v2382 = vunpack.c.l.b16 %v1643
    %v2383 = vunpack.c.h.b16 %v1643
    %v2384 = vunpack.c.l.b16 %v1644
    %v2385 = vunpack.c.h.b16 %v1644
    %v2386 = vunpack.c.l.b16 %v1645
    %v2387 = vunpack.c.h.b16 %v1645
    %v2388 = vunpack.c.l.b16 %v1646
    %v2389 = vunpack.c.h.b16 %v1646
    %v2390 = vunpack.c.l.b16 %v1647
    %v2391 = vunpack.c.h.b16 %v1647
    %v2392 = vunpack.c.l.b16 %v1648
    %v2393 = vunpack.c.h.b16 %v1648
    %v2394 = vunpack.c.l.b16 %v1649
    %v2395 = vunpack.c.h.b16 %v1649
    %v2396 = vunpack.c.l.b16 %v1650
    %v2397 = vunpack.c.h.b16 %v1650
    %v2398 = vunpack.c.l.b16 %v1651
    %v2399 = vunpack.c.h.b16 %v1651
    %v2400 = vunpack.c.l.b16 %v1652
    %v2401 = vunpack.c.h.b16 %v1652
    %v2402 = vunpack.c.l.b16 %v1653
    %v2403 = vunpack.c.h.b16 %v1653
    %v2404 = vunpack.c.l.b16 %v1654
    %v2405 = vunpack.c.h.b16 %v1654
    %v2406 = vunpack.c.l.b16 %v1655
    %v2407 = vunpack.c.h.b16 %v1655
    %v2408 = vunpack.c.l.b16 %v1656
    %v2409 = vunpack.c.h.b16 %v1656
    %v2410 = vunpack.c.l.b16 %v1657
    %v2411 = vunpack.c.h.b16 %v1657
    %v2412 = vunpack.c.l.b16 %v1658
    %v2413 = vunpack.c.h.b16 %v1658
    %v2414 = vunpack.c.l.b16 %v1659
    %v2415 = vunpack.c.h.b16 %v1659
    %v2416 = vunpack.c.l.b16 %v1660
    %v2417 = vunpack.c.h.b16 %v1660
    %v2418 = vunpack.c.l.b16 %v1661
    %v2419 = vunpack.c.h.b16 %v1661
    %v2420 = vunpack.c.l.b16 %v1662
    %v2421 = vunpack.c.h.b16 %v1662
    %v2422 = vunpack.c.l.b16 %v1663
    %v2423 = vunpack.c.h.b16 %v1663
    %v2424 = vunpack.c.l.b16 %v1664
    %v2425 = vunpack.c.h.b16 %v1664
    %v2426 = vunpack.c.l.b16 %v1665
    %v2427 = vunpack.c.h.b16 %v1665
    %v2428 = vunpack.c.l.b16 %v1666
    %v2429 = vunpack.c.h.b16 %v1666
    %v2430 = vunpack.c.l.b16 %v1667
    %v2431 = vunpack.c.h.b16 %v1667
    %v2432 = vunpack.c.l.b16 %v1668
    %v2433 = vunpack.c.h.b16 %v1668
    %v2434 = vunpack.c.l.b16 %v1669
    %v2435 = vunpack.c.h.b16 %v1669
    %v2436 = vunpack.c.l.b16 %v1670
    %v2437 = vunpack.c.h.b16 %v1670
    %v2438 = vunpack.c.l.b16 %v1671
    %v2439 = vunpack.c.h.b16 %v1671
    %v2440 = vpack.c.b16 %v1936, %v1928
    %v2441 = vpack.c.b16 %v1937, %v1929
    %v2442 = vpack.c.b16 %v1938, %v1930
    %v2443 = vpack.c.b16 %v1939, %v1931
    %v2444 = vpack.c.b16 %v1940, %v1932
    %v2445 = vpack.c.b16 %v1941, %v1933
    %v2446 = vpack.c.b16 %v1942, %v1934
    %v2447 = vpack.c.b16 %v1943, %v1935
    %v2448 = vpack.c.b16 %v1952, %v1944
    %v2449 = vpack.c.b16 %v1953, %v1945
    %v2450 = vpack.c.b16 %v1954, %v1946
    %v2451 = vpack.c.b16 %v1955, %v1947
    %v2452 = vpack.c.b16 %v1956, %v1948
    %v2453 = vpack.c.b16 %v1957, %v1949
    %v2454 = vpack.c.b16 %v1958, %v1950
    %v2455 = vpack.c.b16 %v1959, %v1951
    %v2456 = vpack.c.b16 %v1968, %v1960
    %v2457 = vpack.c.b16 %v1969, %v1961
    %v2458 = vpack.c.b16 %v1970, %v1962
    %v2459 = vpack.c.b16 %v1971, %v1963
    %v2460 = vpack.c.b16 %v1972, %v1964
    %v2461 = vpack.c.b16 %v1973, %v1965
    %v2462 = vpack.c.b16 %v1974, %v1966
    %v2463 = vpack.c.b16 %v1975, %v1967
    %v2464 = vpack.c.b16 %v1984, %v1976
    %v2465 = vpack.c.b16 %v1985, %v1977
    %v2466 = vpack.c.b16 %v1986, %v1978
    %v2467 = vpack.c.b16 %v1987, %v1979
    %v2468 = vpack.c.b16 %v1988, %v1980
    %v2469 = vpack.c.b16 %v1989, %v1981
    %v2470 = vpack.c.b16 %v1990, %v1982
    %v2471 = vpack.c.b16 %v1991, %v1983
    %v2472 = vpack.c.b16 %v2000, %v1992
    %v2473 = vpack.c.b16 %v2001, %v1993
    %v2474 = vpack.c.b16 %v2002, %v1994
    %v2475 = vpack.c.b16 %v2003, %v1995
    %v2476 = vpack.c.b16 %v2004, %v1996
    %v2477 = vpack.c.b16 %v2005, %v1997
    %v2478 = vpack.c.b16 %v2006, %v1998
    %v2479 = vpack.c.b16 %v2007, %v1999
    %v2480 = vpack.c.b16 %v2016, %v2008
    %v2481 = vpack.c.b16 %v2017, %v2009
    %v2482 = vpack.c.b16 %v2018, %v2010
    %v2483 = vpack.c.b16 %v2019, %v2011
    %v2484 = vpack.c.b16 %v2020, %v2012
    %v2485 = vpack.c.b16 %v2021, %v2013
    %v2486 = vpack.c.b16 %v2022, %v2014
    %v2487 = vpack.c.b16 %v2023, %v2015
    %v2488 = vpack.c.b16 %v2032, %v2024
    %v2489 = vpack.c.b16 %v2033, %v2025
    %v2490 = vpack.c.b16 %v2034, %v2026
    %v2491 = vpack.c.b16 %v2035, %v2027
    %v2492 = vpack.c.b16 %v2036, %v2028
    %v2493 = vpack.c.b16 %v2037, %v2029
    %v2494 = vpack.c.b16 %v2038, %v2030
    %v2495 = vpack.c.b16 %v2039, %v2031
    %v2496 = vpack.c.b16 %v2048, %v2040
    %v2497 = vpack.c.b16 %v2049, %v2041
    %v2498 = vpack.c.b16 %v2050, %v2042
    %v2499 = vpack.c.b16 %v2051, %v2043
    %v2500 = vpack.c.b16 %v2052, %v2044
    %v2501 = vpack.c.b16 %v2053, %v2045
    %v2502 = vpack.c.b16 %v2054, %v2046
    %v2503 = vpack.c.b16 %v2055, %v2047
    %v2504 = vpack.c.b16 %v2064, %v2056
    %v2505 = vpack.c.b16 %v2065, %v2057
    %v2506 = vpack.c.b16 %v2066, %v2058
    %v2507 = vpack.c.b16 %v2067, %v2059
    %v2508 = vpack.c.b16 %v2068, %v2060
    %v2509 = vpack.c.b16 %v2069, %v2061
    %v2510 = vpack.c.b16 %v2070, %v2062
    %v2511 = vpack.c.b16 %v2071, %v2063
    %v2512 = vpack.c.b16 %v2080, %v2072
    %v2513 = vpack.c.b16 %v2081, %v2073
    %v2514 = vpack.c.b16 %v2082, %v2074
    %v2515 = vpack.c.b16 %v2083, %v2075
    %v2516 = vpack.c.b16 %v2084, %v2076
    %v2517 = vpack.c.b16 %v2085, %v2077
    %v2518 = vpack.c.b16 %v2086, %v2078
    %v2519 = vpack.c.b16 %v2087, %v2079
    %v2520 = vpack.c.b16 %v2096, %v2088
    %v2521 = vpack.c.b16 %v2097, %v2089
    %v2522 = vpack.c.b16 %v2098, %v2090
    %v2523 = vpack.c.b16 %v2099, %v2091
    %v2524 = vpack.c.b16 %v2100, %v2092
    %v2525 = vpack.c.b16 %v2101, %v2093
    %v2526 = vpack.c.b16 %v2102, %v2094
    %v2527 = vpack.c.b16 %v2103, %v2095
    %v2528 = vpack.c.b16 %v2112, %v2104
    %v2529 = vpack.c.b16 %v2113, %v2105
    %v2530 = vpack.c.b16 %v2114, %v2106
    %v2531 = vpack.c.b16 %v2115, %v2107
    %v2532 = vpack.c.b16 %v2116, %v2108
    %v2533 = vpack.c.b16 %v2117, %v2109
    %v2534 = vpack.c.b16 %v2118, %v2110
    %v2535 = vpack.c.b16 %v2119, %v2111
    %v2536 = vpack.c.b16 %v2128, %v2120
    %v2537 = vpack.c.b16 %v2129, %v2121
    %v2538 = vpack.c.b16 %v2130, %v2122
    %v2539 = vpack.c.b16 %v2131, %v2123
    %v2540 = vpack.c.b16 %v2132, %v2124
    %v2541 = vpack.c.b16 %v2133, %v2125
    %v2542 = vpack.c.b16 %v2134, %v2126
    %v2543 = vpack.c.b16 %v2135, %v2127
    %v2544 = vpack.c.b16 %v2144, %v2136
    %v2545 = vpack.c.b16 %v2145, %v2137
    %v2546 = vpack.c.b16 %v2146, %v2138
    %v2547 = vpack.c.b16 %v2147, %v2139
    %v2548 = vpack.c.b16 %v2148, %v2140
    %v2549 = vpack.c.b16 %v2149, %v2141
    %v2550 = vpack.c.b16 %v2150, %v2142
    %v2551 = vpack.c.b16 %v2151, %v2143
    %v2552 = vpack.c.b16 %v2160, %v2152
    %v2553 = vpack.c.b16 %v2161, %v2153
    %v2554 = vpack.c.b16 %v2162, %v2154
    %v2555 = vpack.c.b16 %v2163, %v2155
    %v2556 = vpack.c.b16 %v2164, %v2156
    %v2557 = vpack.c.b16 %v2165, %v2157
    %v2558 = vpack.c.b16 %v2166, %v2158
    %v2559 = vpack.c.b16 %v2167, %v2159
    %v2560 = vpack.c.b16 %v2176, %v2168
    %v2561 = vpack.c.b16 %v2177, %v2169
    %v2562 = vpack.c.b16 %v2178, %v2170
    %v2563 = vpack.c.b16 %v2179, %v2171
    %v2564 = vpack.c.b16 %v2180, %v2172
    %v2565 = vpack.c.b16 %v2181, %v2173
    %v2566 = vpack.c.b16 %v2182, %v2174
    %v2567 = vpack.c.b16 %v2183, %v2175
    %v2568 = vpack.c.b16 %v2192, %v2184
    %v2569 = vpack.c.b16 %v2193, %v2185
    %v2570 = vpack.c.b16 %v2194, %v2186
    %v2571 = vpack.c.b16 %v2195, %v2187
    %v2572 = vpack.c.b16 %v2196, %v2188
    %v2573 = vpack.c.b16 %v2197, %v2189
    %v2574 = vpack.c.b16 %v2198, %v2190
    %v2575 = vpack.c.b16 %v2199, %v2191
    %v2576 = vpack.c.b16 %v2208, %v2200
    %v2577 = vpack.c.b16 %v2209, %v2201
    %v2578 = vpack.c.b16 %v2210, %v2202
    %v2579 = vpack.c.b16 %v2211, %v2203
    %v2580 = vpack.c.b16 %v2212, %v2204
    %v2581 = vpack.c.b16 %v2213, %v2205
    %v2582 = vpack.c.b16 %v2214, %v2206
    %v2583 = vpack.c.b16 %v2215, %v2207
    %v2584 = vpack.c.b16 %v2224, %v2216
    %v2585 = vpack.c.b16 %v2225, %v2217
    %v2586 = vpack.c.b16 %v2226, %v2218
    %v2587 = vpack.c.b16 %v2227, %v2219
    %v2588 = vpack.c.b16 %v2228, %v2220
    %v2589 = vpack.c.b16 %v2229, %v2221
    %v2590 = vpack.c.b16 %v2230, %v2222
    %v2591 = vpack.c.b16 %v2231, %v2223
    %v2592 = vpack.c.b16 %v2240, %v2232
    %v2593 = vpack.c.b16 %v2241, %v2233
    %v2594 = vpack.c.b16 %v2242, %v2234
    %v2595 = vpack.c.b16 %v2243, %v2235
    %v2596 = vpack.c.b16 %v2244, %v2236
    %v2597 = vpack.c.b16 %v2245, %v2237
    %v2598 = vpack.c.b16 %v2246, %v2238
    %v2599 = vpack.c.b16 %v2247, %v2239
    %v2600 = vpack.c.b16 %v2256, %v2248
    %v2601 = vpack.c.b16 %v2257, %v2249
    %v2602 = vpack.c.b16 %v2258, %v2250
    %v2603 = vpack.c.b16 %v2259, %v2251
    %v2604 = vpack.c.b16 %v2260, %v2252
    %v2605 = vpack.c.b16 %v2261, %v2253
    %v2606 = vpack.c.b16 %v2262, %v2254
    %v2607 = vpack.c.b16 %v2263, %v2255
    %v2608 = vpack.c.b16 %v2272, %v2264
    %v2609 = vpack.c.b16 %v2273, %v2265
    %v2610 = vpack.c.b16 %v2274, %v2266
    %v2611 = vpack.c.b16 %v2275, %v2267
    %v2612 = vpack.c.b16 %v2276, %v2268
    %v2613 = vpack.c.b16 %v2277, %v2269
    %v2614 = vpack.c.b16 %v2278, %v2270
    %v2615 = vpack.c.b16 %v2279, %v2271
    %v2616 = vpack.c.b16 %v2288, %v2280
    %v2617 = vpack.c.b16 %v2289, %v2281
    %v2618 = vpack.c.b16 %v2290, %v2282
    %v2619 = vpack.c.b16 %v2291, %v2283
    %v2620 = vpack.c.b16 %v2292, %v2284
    %v2621 = vpack.c.b16 %v2293, %v2285
    %v2622 = vpack.c.b16 %v2294, %v2286
    %v2623 = vpack.c.b16 %v2295, %v2287
    %v2624 = vpack.c.b16 %v2304, %v2296
    %v2625 = vpack.c.b16 %v2305, %v2297
    %v2626 = vpack.c.b16 %v2306, %v2298
    %v2627 = vpack.c.b16 %v2307, %v2299
    %v2628 = vpack.c.b16 %v2308, %v2300
    %v2629 = vpack.c.b16 %v2309, %v2301
    %v2630 = vpack.c.b16 %v2310, %v2302
    %v2631 = vpack.c.b16 %v2311, %v2303
    %v2632 = vpack.c.b16 %v2320, %v2312
    %v2633 = vpack.c.b16 %v2321, %v2313
    %v2634 = vpack.c.b16 %v2322, %v2314
    %v2635 = vpack.c.b16 %v2323, %v2315
    %v2636 = vpack.c.b16 %v2324, %v2316
    %v2637 = vpack.c.b16 %v2325, %v2317
    %v2638 = vpack.c.b16 %v2326, %v2318
    %v2639 = vpack.c.b16 %v2327, %v2319
    %v2640 = vpack.c.b16 %v2336, %v2328
    %v2641 = vpack.c.b16 %v2337, %v2329
    %v2642 = vpack.c.b16 %v2338, %v2330
    %v2643 = vpack.c.b16 %v2339, %v2331
    %v2644 = vpack.c.b16 %v2340, %v2332
    %v2645 = vpack.c.b16 %v2341, %v2333
    %v2646 = vpack.c.b16 %v2342, %v2334
    %v2647 = vpack.c.b16 %v2343, %v2335
    %v2648 = vpack.c.b16 %v2352, %v2344
    %v2649 = vpack.c.b16 %v2353, %v2345
    %v2650 = vpack.c.b16 %v2354, %v2346
    %v2651 = vpack.c.b16 %v2355, %v2347
    %v2652 = vpack.c.b16 %v2356, %v2348
    %v2653 = vpack.c.b16 %v2357, %v2349
    %v2654 = vpack.c.b16 %v2358, %v2350
    %v2655 = vpack.c.b16 %v2359, %v2351
    %v2656 = vpack.c.b16 %v2368, %v2360
    %v2657 = vpack.c.b16 %v2369, %v2361
    %v2658 = vpack.c.b16 %v2370, %v2362
    %v2659 = vpack.c.b16 %v2371, %v2363
    %v2660 = vpack.c.b16 %v2372, %v2364
    %v2661 = vpack.c.b16 %v2373, %v2365
    %v2662 = vpack.c.b16 %v2374, %v2366
    %v2663 = vpack.c.b16 %v2375, %v2367
    %v2664 = vpack.c.b16 %v2384, %v2376
    %v2665 = vpack.c.b16 %v2385, %v2377
    %v2666 = vpack.c.b16 %v2386, %v2378
    %v2667 = vpack.c.b16 %v2387, %v2379
    %v2668 = vpack.c.b16 %v2388, %v2380
    %v2669 = vpack.c.b16 %v2389, %v2381
    %v2670 = vpack.c.b16 %v2390, %v2382
    %v2671 = vpack.c.b16 %v2391, %v2383
    %v2672 = vpack.c.b16 %v2400, %v2392
    %v2673 = vpack.c.b16 %v2401, %v2393
    %v2674 = vpack.c.b16 %v2402, %v2394
    %v2675 = vpack.c.b16 %v2403, %v2395
    %v2676 = vpack.c.b16 %v2404, %v2396
    %v2677 = vpack.c.b16 %v2405, %v2397
    %v2678 = vpack.c.b16 %v2406, %v2398
    %v2679 = vpack.c.b16 %v2407, %v2399
    %v2680 = vpack.c.b16 %v2416, %v2408
    %v2681 = vpack.c.b16 %v2417, %v2409
    %v2682 = vpack.c.b16 %v2418, %v2410
    %v2683 = vpack.c.b16 %v2419, %v2411
    %v2684 = vpack.c.b16 %v2420, %v2412
    %v2685 = vpack.c.b16 %v2421, %v2413
    %v2686 = vpack.c.b16 %v2422, %v2414
    %v2687 = vpack.c.b16 %v2423, %v2415
    %v2688 = vpack.c.b16 %v2432, %v2424
    %v2689 = vpack.c.b16 %v2433, %v2425
    %v2690 = vpack.c.b16 %v2434, %v2426
    %v2691 = vpack.c.b16 %v2435, %v2427
    %v2692 = vpack.c.b16 %v2436, %v2428
    %v2693 = vpack.c.b16 %v2437, %v2429
    %v2694 = vpack.c.b16 %v2438, %v2430
    %v2695 = vpack.c.b16 %v2439, %v2431
    %2952 = vmatpush.bf16.msra.mxu0 %v2496
    %2953 = vmatpush.bf16.msra.mxu0 %v2488
    %2954 = vmatpush.bf16.msra.mxu0 %v2480
    %2955 = vmatpush.bf16.msra.mxu0 %v2472
    %2956 = vmatpush.bf16.msra.mxu0 %v2464
    %2957 = vmatpush.bf16.msra.mxu0 %v2456
    %2958 = vmatpush.bf16.msra.mxu0 %v2448
    %2959 = vmatpush.bf16.msra.mxu0 %v2440
    %2960 = vmatmul.bf16.gmra.mxu0 %v1412
    %v2961 = vpop.f32.mrf.mxu0
    %v2962 = vadd.f32 0.0, %v2961
    %v2963 = vpop.f32.mrf.mxu0
    %2964 = vdwg.mxu0
    %2965 = vmatpush.bf16.msra.mxu0 %v2560
    %2966 = vmatpush.bf16.msra.mxu0 %v2552
    %2967 = vmatpush.bf16.msra.mxu0 %v2544
    %2968 = vmatpush.bf16.msra.mxu0 %v2536
    %2969 = vmatpush.bf16.msra.mxu0 %v2528
    %2970 = vmatpush.bf16.msra.mxu0 %v2520
    %2971 = vmatpush.bf16.msra.mxu0 %v2512
    %2972 = vmatpush.bf16.msra.mxu0 %v2504
    %2973 = vmatmul.bf16.gmra.mxu0 %v1413
    %v2974 = vpop.f32.mrf.mxu0
    %v2975 = vadd.f32 %v2962, %v2974
    %v2976 = vpop.f32.mrf.mxu0
    %2977 = vdwg.mxu0
    %2978 = vmatpush.bf16.msra.mxu0 %v2624
    %2979 = vmatpush.bf16.msra.mxu0 %v2616
    %2980 = vmatpush.bf16.msra.mxu0 %v2608
    %2981 = vmatpush.bf16.msra.mxu0 %v2600
    %2982 = vmatpush.bf16.msra.mxu0 %v2592
    %2983 = vmatpush.bf16.msra.mxu0 %v2584
    %2984 = vmatpush.bf16.msra.mxu0 %v2576
    %2985 = vmatpush.bf16.msra.mxu0 %v2568
    %2986 = vmatmul.bf16.gmra.mxu0 %v1414
    %v2987 = vpop.f32.mrf.mxu0
    %v2988 = vadd.f32 %v2975, %v2987
    %v2989 = vpop.f32.mrf.mxu0
    %2990 = vdwg.mxu0
    %2991 = vmatpush.bf16.msra.mxu0 %v2688
    %2992 = vmatpush.bf16.msra.mxu0 %v2680
    %2993 = vmatpush.bf16.msra.mxu0 %v2672
    %2994 = vmatpush.bf16.msra.mxu0 %v2664
    %2995 = vmatpush.bf16.msra.mxu0 %v2656
    %2996 = vmatpush.bf16.msra.mxu0 %v2648
    %2997 = vmatpush.bf16.msra.mxu0 %v2640
    %2998 = vmatpush.bf16.msra.mxu0 %v2632
    %2999 = vmatmul.bf16.gmra.mxu0 %v1415
    %v3000 = vpop.f32.mrf.mxu0
    %v3001 = vadd.f32 %v2988, %v3000
    %v3002 = vpop.f32.mrf.mxu0
    %3003 = vdwg.mxu0
    %3004 = vmatpush.bf16.msra.mxu0 %v2497
    %3005 = vmatpush.bf16.msra.mxu0 %v2489
    %3006 = vmatpush.bf16.msra.mxu0 %v2481
    %3007 = vmatpush.bf16.msra.mxu0 %v2473
    %3008 = vmatpush.bf16.msra.mxu0 %v2465
    %3009 = vmatpush.bf16.msra.mxu0 %v2457
    %3010 = vmatpush.bf16.msra.mxu0 %v2449
    %3011 = vmatpush.bf16.msra.mxu0 %v2441
    %3012 = vmatmul.bf16.gmra.mxu0 %v1412
    %v3013 = vpop.f32.mrf.mxu0
    %v3014 = vadd.f32 0.0, %v3013
    %v3015 = vpop.f32.mrf.mxu0
    %3016 = vdwg.mxu0
    %3017 = vmatpush.bf16.msra.mxu0 %v2561
    %3018 = vmatpush.bf16.msra.mxu0 %v2553
    %3019 = vmatpush.bf16.msra.mxu0 %v2545
    %3020 = vmatpush.bf16.msra.mxu0 %v2537
    %3021 = vmatpush.bf16.msra.mxu0 %v2529
    %3022 = vmatpush.bf16.msra.mxu0 %v2521
    %3023 = vmatpush.bf16.msra.mxu0 %v2513
    %3024 = vmatpush.bf16.msra.mxu0 %v2505
    %3025 = vmatmul.bf16.gmra.mxu0 %v1413
    %v3026 = vpop.f32.mrf.mxu0
    %v3027 = vadd.f32 %v3014, %v3026
    %v3028 = vpop.f32.mrf.mxu0
    %3029 = vdwg.mxu0
    %3030 = vmatpush.bf16.msra.mxu0 %v2625
    %3031 = vmatpush.bf16.msra.mxu0 %v2617
    %3032 = vmatpush.bf16.msra.mxu0 %v2609
    %3033 = vmatpush.bf16.msra.mxu0 %v2601
    %3034 = vmatpush.bf16.msra.mxu0 %v2593
    %3035 = vmatpush.bf16.msra.mxu0 %v2585
    %3036 = vmatpush.bf16.msra.mxu0 %v2577
    %3037 = vmatpush.bf16.msra.mxu0 %v2569
    %3038 = vmatmul.bf16.gmra.mxu0 %v1414
    %v3039 = vpop.f32.mrf.mxu0
    %v3040 = vadd.f32 %v3027, %v3039
    %v3041 = vpop.f32.mrf.mxu0
    %3042 = vdwg.mxu0
    %3043 = vmatpush.bf16.msra.mxu0 %v2689
    %3044 = vmatpush.bf16.msra.mxu0 %v2681
    %3045 = vmatpush.bf16.msra.mxu0 %v2673
    %3046 = vmatpush.bf16.msra.mxu0 %v2665
    %3047 = vmatpush.bf16.msra.mxu0 %v2657
    %3048 = vmatpush.bf16.msra.mxu0 %v2649
    %3049 = vmatpush.bf16.msra.mxu0 %v2641
    %3050 = vmatpush.bf16.msra.mxu0 %v2633
    %3051 = vmatmul.bf16.gmra.mxu0 %v1415
    %v3052 = vpop.f32.mrf.mxu0
    %v3053 = vadd.f32 %v3040, %v3052
    %v3054 = vpop.f32.mrf.mxu0
    %3055 = vdwg.mxu0
    %3056 = vmatpush.bf16.msra.mxu0 %v2498
    %3057 = vmatpush.bf16.msra.mxu0 %v2490
    %3058 = vmatpush.bf16.msra.mxu0 %v2482
    %3059 = vmatpush.bf16.msra.mxu0 %v2474
    %3060 = vmatpush.bf16.msra.mxu0 %v2466
    %3061 = vmatpush.bf16.msra.mxu0 %v2458
    %3062 = vmatpush.bf16.msra.mxu0 %v2450
    %3063 = vmatpush.bf16.msra.mxu0 %v2442
    %3064 = vmatmul.bf16.gmra.mxu0 %v1412
    %v3065 = vpop.f32.mrf.mxu0
    %v3066 = vadd.f32 0.0, %v3065
    %v3067 = vpop.f32.mrf.mxu0
    %3068 = vdwg.mxu0
    %3069 = vmatpush.bf16.msra.mxu0 %v2562
    %3070 = vmatpush.bf16.msra.mxu0 %v2554
    %3071 = vmatpush.bf16.msra.mxu0 %v2546
    %3072 = vmatpush.bf16.msra.mxu0 %v2538
    %3073 = vmatpush.bf16.msra.mxu0 %v2530
    %3074 = vmatpush.bf16.msra.mxu0 %v2522
    %3075 = vmatpush.bf16.msra.mxu0 %v2514
    %3076 = vmatpush.bf16.msra.mxu0 %v2506
    %3077 = vmatmul.bf16.gmra.mxu0 %v1413
    %v3078 = vpop.f32.mrf.mxu0
    %v3079 = vadd.f32 %v3066, %v3078
    %v3080 = vpop.f32.mrf.mxu0
    %3081 = vdwg.mxu0
    %3082 = vmatpush.bf16.msra.mxu0 %v2626
    %3083 = vmatpush.bf16.msra.mxu0 %v2618
    %3084 = vmatpush.bf16.msra.mxu0 %v2610
    %3085 = vmatpush.bf16.msra.mxu0 %v2602
    %3086 = vmatpush.bf16.msra.mxu0 %v2594
    %3087 = vmatpush.bf16.msra.mxu0 %v2586
    %3088 = vmatpush.bf16.msra.mxu0 %v2578
    %3089 = vmatpush.bf16.msra.mxu0 %v2570
    %3090 = vmatmul.bf16.gmra.mxu0 %v1414
    %v3091 = vpop.f32.mrf.mxu0
    %v3092 = vadd.f32 %v3079, %v3091
    %v3093 = vpop.f32.mrf.mxu0
    %3094 = vdwg.mxu0
    %3095 = vmatpush.bf16.msra.mxu0 %v2690
    %3096 = vmatpush.bf16.msra.mxu0 %v2682
    %3097 = vmatpush.bf16.msra.mxu0 %v2674
    %3098 = vmatpush.bf16.msra.mxu0 %v2666
    %3099 = vmatpush.bf16.msra.mxu0 %v2658
    %3100 = vmatpush.bf16.msra.mxu0 %v2650
    %3101 = vmatpush.bf16.msra.mxu0 %v2642
    %3102 = vmatpush.bf16.msra.mxu0 %v2634
    %3103 = vmatmul.bf16.gmra.mxu0 %v1415
    %v3104 = vpop.f32.mrf.mxu0
    %v3105 = vadd.f32 %v3092, %v3104
    %v3106 = vpop.f32.mrf.mxu0
    %3107 = vdwg.mxu0
    %3108 = vmatpush.bf16.msra.mxu0 %v2499
    %3109 = vmatpush.bf16.msra.mxu0 %v2491
    %3110 = vmatpush.bf16.msra.mxu0 %v2483
    %3111 = vmatpush.bf16.msra.mxu0 %v2475
    %3112 = vmatpush.bf16.msra.mxu0 %v2467
    %3113 = vmatpush.bf16.msra.mxu0 %v2459
    %3114 = vmatpush.bf16.msra.mxu0 %v2451
    %3115 = vmatpush.bf16.msra.mxu0 %v2443
    %3116 = vmatmul.bf16.gmra.mxu0 %v1412
    %v3117 = vpop.f32.mrf.mxu0
    %v3118 = vadd.f32 0.0, %v3117
    %v3119 = vpop.f32.mrf.mxu0
    %3120 = vdwg.mxu0
    %3121 = vmatpush.bf16.msra.mxu0 %v2563
    %3122 = vmatpush.bf16.msra.mxu0 %v2555
    %3123 = vmatpush.bf16.msra.mxu0 %v2547
    %3124 = vmatpush.bf16.msra.mxu0 %v2539
    %3125 = vmatpush.bf16.msra.mxu0 %v2531
    %3126 = vmatpush.bf16.msra.mxu0 %v2523
    %3127 = vmatpush.bf16.msra.mxu0 %v2515
    %3128 = vmatpush.bf16.msra.mxu0 %v2507
    %3129 = vmatmul.bf16.gmra.mxu0 %v1413
    %v3130 = vpop.f32.mrf.mxu0
    %v3131 = vadd.f32 %v3118, %v3130
    %v3132 = vpop.f32.mrf.mxu0
    %3133 = vdwg.mxu0
    %3134 = vmatpush.bf16.msra.mxu0 %v2627
    %3135 = vmatpush.bf16.msra.mxu0 %v2619
    %3136 = vmatpush.bf16.msra.mxu0 %v2611
    %3137 = vmatpush.bf16.msra.mxu0 %v2603
    %3138 = vmatpush.bf16.msra.mxu0 %v2595
    %3139 = vmatpush.bf16.msra.mxu0 %v2587
    %3140 = vmatpush.bf16.msra.mxu0 %v2579
    %3141 = vmatpush.bf16.msra.mxu0 %v2571
    %3142 = vmatmul.bf16.gmra.mxu0 %v1414
    %v3143 = vpop.f32.mrf.mxu0
    %v3144 = vadd.f32 %v3131, %v3143
    %v3145 = vpop.f32.mrf.mxu0
    %3146 = vdwg.mxu0
    %3147 = vmatpush.bf16.msra.mxu0 %v2691
    %3148 = vmatpush.bf16.msra.mxu0 %v2683
    %3149 = vmatpush.bf16.msra.mxu0 %v2675
    %3150 = vmatpush.bf16.msra.mxu0 %v2667
    %3151 = vmatpush.bf16.msra.mxu0 %v2659
    %3152 = vmatpush.bf16.msra.mxu0 %v2651
    %3153 = vmatpush.bf16.msra.mxu0 %v2643
    %3154 = vmatpush.bf16.msra.mxu0 %v2635
    %3155 = vmatmul.bf16.gmra.mxu0 %v1415
    %v3156 = vpop.f32.mrf.mxu0
    %v3157 = vadd.f32 %v3144, %v3156
    %v3158 = vpop.f32.mrf.mxu0
    %3159 = vdwg.mxu0
    %3160 = vmatpush.bf16.msra.mxu0 %v2500
    %3161 = vmatpush.bf16.msra.mxu0 %v2492
    %3162 = vmatpush.bf16.msra.mxu0 %v2484
    %3163 = vmatpush.bf16.msra.mxu0 %v2476
    %3164 = vmatpush.bf16.msra.mxu0 %v2468
    %3165 = vmatpush.bf16.msra.mxu0 %v2460
    %3166 = vmatpush.bf16.msra.mxu0 %v2452
    %3167 = vmatpush.bf16.msra.mxu0 %v2444
    %3168 = vmatmul.bf16.gmra.mxu0 %v1412
    %v3169 = vpop.f32.mrf.mxu0
    %v3170 = vadd.f32 0.0, %v3169
    %v3171 = vpop.f32.mrf.mxu0
    %3172 = vdwg.mxu0
    %3173 = vmatpush.bf16.msra.mxu0 %v2564
    %3174 = vmatpush.bf16.msra.mxu0 %v2556
    %3175 = vmatpush.bf16.msra.mxu0 %v2548
    %3176 = vmatpush.bf16.msra.mxu0 %v2540
    %3177 = vmatpush.bf16.msra.mxu0 %v2532
    %3178 = vmatpush.bf16.msra.mxu0 %v2524
    %3179 = vmatpush.bf16.msra.mxu0 %v2516
    %3180 = vmatpush.bf16.msra.mxu0 %v2508
    %3181 = vmatmul.bf16.gmra.mxu0 %v1413
    %v3182 = vpop.f32.mrf.mxu0
    %v3183 = vadd.f32 %v3170, %v3182
    %v3184 = vpop.f32.mrf.mxu0
    %3185 = vdwg.mxu0
    %3186 = vmatpush.bf16.msra.mxu0 %v2628
    %3187 = vmatpush.bf16.msra.mxu0 %v2620
    %3188 = vmatpush.bf16.msra.mxu0 %v2612
    %3189 = vmatpush.bf16.msra.mxu0 %v2604
    %3190 = vmatpush.bf16.msra.mxu0 %v2596
    %3191 = vmatpush.bf16.msra.mxu0 %v2588
    %3192 = vmatpush.bf16.msra.mxu0 %v2580
    %3193 = vmatpush.bf16.msra.mxu0 %v2572
    %3194 = vmatmul.bf16.gmra.mxu0 %v1414
    %v3195 = vpop.f32.mrf.mxu0
    %v3196 = vadd.f32 %v3183, %v3195
    %v3197 = vpop.f32.mrf.mxu0
    %3198 = vdwg.mxu0
    %3199 = vmatpush.bf16.msra.mxu0 %v2692
    %3200 = vmatpush.bf16.msra.mxu0 %v2684
    %3201 = vmatpush.bf16.msra.mxu0 %v2676
    %3202 = vmatpush.bf16.msra.mxu0 %v2668
    %3203 = vmatpush.bf16.msra.mxu0 %v2660
    %3204 = vmatpush.bf16.msra.mxu0 %v2652
    %3205 = vmatpush.bf16.msra.mxu0 %v2644
    %3206 = vmatpush.bf16.msra.mxu0 %v2636
    %3207 = vmatmul.bf16.gmra.mxu0 %v1415
    %v3208 = vpop.f32.mrf.mxu0
    %v3209 = vadd.f32 %v3196, %v3208
    %v3210 = vpop.f32.mrf.mxu0
    %3211 = vdwg.mxu0
    %3212 = vmatpush.bf16.msra.mxu0 %v2501
    %3213 = vmatpush.bf16.msra.mxu0 %v2493
    %3214 = vmatpush.bf16.msra.mxu0 %v2485
    %3215 = vmatpush.bf16.msra.mxu0 %v2477
    %3216 = vmatpush.bf16.msra.mxu0 %v2469
    %3217 = vmatpush.bf16.msra.mxu0 %v2461
    %3218 = vmatpush.bf16.msra.mxu0 %v2453
    %3219 = vmatpush.bf16.msra.mxu0 %v2445
    %3220 = vmatmul.bf16.gmra.mxu0 %v1412
    %v3221 = vpop.f32.mrf.mxu0
    %v3222 = vadd.f32 0.0, %v3221
    %v3223 = vpop.f32.mrf.mxu0
    %3224 = vdwg.mxu0
    %3225 = vmatpush.bf16.msra.mxu0 %v2565
    %3226 = vmatpush.bf16.msra.mxu0 %v2557
    %3227 = vmatpush.bf16.msra.mxu0 %v2549
    %3228 = vmatpush.bf16.msra.mxu0 %v2541
    %3229 = vmatpush.bf16.msra.mxu0 %v2533
    %3230 = vmatpush.bf16.msra.mxu0 %v2525
    %3231 = vmatpush.bf16.msra.mxu0 %v2517
    %3232 = vmatpush.bf16.msra.mxu0 %v2509
    %3233 = vmatmul.bf16.gmra.mxu0 %v1413
    %v3234 = vpop.f32.mrf.mxu0
    %v3235 = vadd.f32 %v3222, %v3234
    %v3236 = vpop.f32.mrf.mxu0
    %3237 = vdwg.mxu0
    %3238 = vmatpush.bf16.msra.mxu0 %v2629
    %3239 = vmatpush.bf16.msra.mxu0 %v2621
    %3240 = vmatpush.bf16.msra.mxu0 %v2613
    %3241 = vmatpush.bf16.msra.mxu0 %v2605
    %3242 = vmatpush.bf16.msra.mxu0 %v2597
    %3243 = vmatpush.bf16.msra.mxu0 %v2589
    %3244 = vmatpush.bf16.msra.mxu0 %v2581
    %3245 = vmatpush.bf16.msra.mxu0 %v2573
    %3246 = vmatmul.bf16.gmra.mxu0 %v1414
    %v3247 = vpop.f32.mrf.mxu0
    %v3248 = vadd.f32 %v3235, %v3247
    %v3249 = vpop.f32.mrf.mxu0
    %3250 = vdwg.mxu0
    %3251 = vmatpush.bf16.msra.mxu0 %v2693
    %3252 = vmatpush.bf16.msra.mxu0 %v2685
    %3253 = vmatpush.bf16.msra.mxu0 %v2677
    %3254 = vmatpush.bf16.msra.mxu0 %v2669
    %3255 = vmatpush.bf16.msra.mxu0 %v2661
    %3256 = vmatpush.bf16.msra.mxu0 %v2653
    %3257 = vmatpush.bf16.msra.mxu0 %v2645
    %3258 = vmatpush.bf16.msra.mxu0 %v2637
    %3259 = vmatmul.bf16.gmra.mxu0 %v1415
    %v3260 = vpop.f32.mrf.mxu0
    %v3261 = vadd.f32 %v3248, %v3260
    %v3262 = vpop.f32.mrf.mxu0
    %3263 = vdwg.mxu0
    %3264 = vmatpush.bf16.msra.mxu0 %v2502
    %3265 = vmatpush.bf16.msra.mxu0 %v2494
    %3266 = vmatpush.bf16.msra.mxu0 %v2486
    %3267 = vmatpush.bf16.msra.mxu0 %v2478
    %3268 = vmatpush.bf16.msra.mxu0 %v2470
    %3269 = vmatpush.bf16.msra.mxu0 %v2462
    %3270 = vmatpush.bf16.msra.mxu0 %v2454
    %3271 = vmatpush.bf16.msra.mxu0 %v2446
    %3272 = vmatmul.bf16.gmra.mxu0 %v1412
    %v3273 = vpop.f32.mrf.mxu0
    %v3274 = vadd.f32 0.0, %v3273
    %v3275 = vpop.f32.mrf.mxu0
    %3276 = vdwg.mxu0
    %3277 = vmatpush.bf16.msra.mxu0 %v2566
    %3278 = vmatpush.bf16.msra.mxu0 %v2558
    %3279 = vmatpush.bf16.msra.mxu0 %v2550
    %3280 = vmatpush.bf16.msra.mxu0 %v2542
    %3281 = vmatpush.bf16.msra.mxu0 %v2534
    %3282 = vmatpush.bf16.msra.mxu0 %v2526
    %3283 = vmatpush.bf16.msra.mxu0 %v2518
    %3284 = vmatpush.bf16.msra.mxu0 %v2510
    %3285 = vmatmul.bf16.gmra.mxu0 %v1413
    %v3286 = vpop.f32.mrf.mxu0
    %v3287 = vadd.f32 %v3274, %v3286
    %v3288 = vpop.f32.mrf.mxu0
    %3289 = vdwg.mxu0
    %3290 = vmatpush.bf16.msra.mxu0 %v2630
    %3291 = vmatpush.bf16.msra.mxu0 %v2622
    %3292 = vmatpush.bf16.msra.mxu0 %v2614
    %3293 = vmatpush.bf16.msra.mxu0 %v2606
    %3294 = vmatpush.bf16.msra.mxu0 %v2598
    %3295 = vmatpush.bf16.msra.mxu0 %v2590
    %3296 = vmatpush.bf16.msra.mxu0 %v2582
    %3297 = vmatpush.bf16.msra.mxu0 %v2574
    %3298 = vmatmul.bf16.gmra.mxu0 %v1414
    %v3299 = vpop.f32.mrf.mxu0
    %v3300 = vadd.f32 %v3287, %v3299
    %v3301 = vpop.f32.mrf.mxu0
    %3302 = vdwg.mxu0
    %3303 = vmatpush.bf16.msra.mxu0 %v2694
    %3304 = vmatpush.bf16.msra.mxu0 %v2686
    %3305 = vmatpush.bf16.msra.mxu0 %v2678
    %3306 = vmatpush.bf16.msra.mxu0 %v2670
    %3307 = vmatpush.bf16.msra.mxu0 %v2662
    %3308 = vmatpush.bf16.msra.mxu0 %v2654
    %3309 = vmatpush.bf16.msra.mxu0 %v2646
    %3310 = vmatpush.bf16.msra.mxu0 %v2638
    %3311 = vmatmul.bf16.gmra.mxu0 %v1415
    %v3312 = vpop.f32.mrf.mxu0
    %v3313 = vadd.f32 %v3300, %v3312
    %v3314 = vpop.f32.mrf.mxu0
    %3315 = vdwg.mxu0
    %3316 = vmatpush.bf16.msra.mxu0 %v2503
    %3317 = vmatpush.bf16.msra.mxu0 %v2495
    %3318 = vmatpush.bf16.msra.mxu0 %v2487
    %3319 = vmatpush.bf16.msra.mxu0 %v2479
    %3320 = vmatpush.bf16.msra.mxu0 %v2471
    %3321 = vmatpush.bf16.msra.mxu0 %v2463
    %3322 = vmatpush.bf16.msra.mxu0 %v2455
    %3323 = vmatpush.bf16.msra.mxu0 %v2447
    %3324 = vmatmul.bf16.gmra.mxu0 %v1412
    %v3325 = vpop.f32.mrf.mxu0
    %v3326 = vadd.f32 0.0, %v3325
    %v3327 = vpop.f32.mrf.mxu0
    %3328 = vdwg.mxu0
    %3329 = vmatpush.bf16.msra.mxu0 %v2567
    %3330 = vmatpush.bf16.msra.mxu0 %v2559
    %3331 = vmatpush.bf16.msra.mxu0 %v2551
    %3332 = vmatpush.bf16.msra.mxu0 %v2543
    %3333 = vmatpush.bf16.msra.mxu0 %v2535
    %3334 = vmatpush.bf16.msra.mxu0 %v2527
    %3335 = vmatpush.bf16.msra.mxu0 %v2519
    %3336 = vmatpush.bf16.msra.mxu0 %v2511
    %3337 = vmatmul.bf16.gmra.mxu0 %v1413
    %v3338 = vpop.f32.mrf.mxu0
    %v3339 = vadd.f32 %v3326, %v3338
    %v3340 = vpop.f32.mrf.mxu0
    %3341 = vdwg.mxu0
    %3342 = vmatpush.bf16.msra.mxu0 %v2631
    %3343 = vmatpush.bf16.msra.mxu0 %v2623
    %3344 = vmatpush.bf16.msra.mxu0 %v2615
    %3345 = vmatpush.bf16.msra.mxu0 %v2607
    %3346 = vmatpush.bf16.msra.mxu0 %v2599
    %3347 = vmatpush.bf16.msra.mxu0 %v2591
    %3348 = vmatpush.bf16.msra.mxu0 %v2583
    %3349 = vmatpush.bf16.msra.mxu0 %v2575
    %3350 = vmatmul.bf16.gmra.mxu0 %v1414
    %v3351 = vpop.f32.mrf.mxu0
    %v3352 = vadd.f32 %v3339, %v3351
    %v3353 = vpop.f32.mrf.mxu0
    %3354 = vdwg.mxu0
    %3355 = vmatpush.bf16.msra.mxu0 %v2695
    %3356 = vmatpush.bf16.msra.mxu0 %v2687
    %3357 = vmatpush.bf16.msra.mxu0 %v2679
    %3358 = vmatpush.bf16.msra.mxu0 %v2671
    %3359 = vmatpush.bf16.msra.mxu0 %v2663
    %3360 = vmatpush.bf16.msra.mxu0 %v2655
    %3361 = vmatpush.bf16.msra.mxu0 %v2647
    %3362 = vmatpush.bf16.msra.mxu0 %v2639
    %3363 = vmatmul.bf16.gmra.mxu0 %v1415
    %v3364 = vpop.f32.mrf.mxu0
    %v3365 = vadd.f32 %v3352, %v3364
    %v3366 = vpop.f32.mrf.mxu0
    %3367 = vdwg.mxu0
    %v3369 = vperm.slane %v102, 0
    %v3370 = vperm.slane %v102, 1
    %v3371 = vperm.slane %v102, 2
    %v3372 = vperm.slane %v102, 3
    %v3373 = vperm.slane %v102, 4
    %v3374 = vperm.slane %v102, 5
    %v3375 = vperm.slane %v102, 6
    %v3376 = vperm.slane %v102, 7
    %v3385 = vmul.f32 %v3001, %v3369
    %v3386 = vmul.f32 %v3053, %v3370
    %v3387 = vmul.f32 %v3105, %v3371
    %v3388 = vmul.f32 %v3157, %v3372
    %v3389 = vmul.f32 %v3209, %v3373
    %v3390 = vmul.f32 %v3261, %v3374
    %v3391 = vmul.f32 %v3313, %v3375
    %v3392 = vmul.f32 %v3365, %v3376
    %v3394 = vperm.slane %v101, 0
    %v3395 = vperm.slane %v101, 1
    %v3396 = vperm.slane %v101, 2
    %v3397 = vperm.slane %v101, 3
    %v3398 = vperm.slane %v101, 4
    %v3399 = vperm.slane %v101, 5
    %v3400 = vperm.slane %v101, 6
    %v3401 = vperm.slane %v101, 7
    %v3410 = vadd.f32 %v3385, %v3394
    %v3411 = vadd.f32 %v3386, %v3395
    %v3412 = vadd.f32 %v3387, %v3396
    %v3413 = vadd.f32 %v3388, %v3397
    %v3414 = vadd.f32 %v3389, %v3398
    %v3415 = vadd.f32 %v3390, %v3399
    %v3416 = vadd.f32 %v3391, %v3400
    %v3417 = vadd.f32 %v3392, %v3401
    %v3418 = vtanh.pop %v3410
    %v3419 = vtanh.pop %v3411
    %v3420 = vtanh.pop %v3412
    %v3421 = vtanh.pop %v3413
    %v3422 = vtanh.pop %v3414
    %v3423 = vtanh.pop %v3415
    %v3424 = vtanh.pop %v3416
    %v3425 = vtanh.pop %v3417
    %3426 = vst [vmem:[#allocation11] sm:$0xff] %v3418
    %3427 = vst [vmem:[#allocation11 + $0x8] sm:$0xff] %v3419
    %3428 = vst [vmem:[#allocation11 + $0x10] sm:$0xff] %v3420
    %3429 = vst [vmem:[#allocation11 + $0x18] sm:$0xff] %v3421
    %3430 = vst [vmem:[#allocation11 + $0x20] sm:$0xff] %v3422
    %3431 = vst [vmem:[#allocation11 + $0x28] sm:$0xff] %v3423
    %3432 = vst [vmem:[#allocation11 + $0x30] sm:$0xff] %v3424
    %3433 = vst [vmem:[#allocation11 + $0x38] sm:$0xff] %v3425
    // Predicated region
    $region42: #{tpu_custom_call.1} parent=1 // pred_check
      _
    $region43: #{tpu_custom_call.1} parent=1 // pred_check_branch
      %3435 = sbr.rel (0) target = $region45
    $region44: #{tpu_custom_call.1} parent=1 // pred_region
      %3437 = vsyncadd [#allocation4], 0
      %s3439 = sshll.u32 [#allocation11], 4
      %s3440 = int_to_ptr.vmem [resolvable:$true] %s3439
      %s3441 = sshll.u32 %s5, 4
      %s3442 = int_to_ptr.hbm [resolvable:$true] %s3441
      %3444 = dma.vmem_to_hbm [thread:$0]  %s3440, 1024, %s3442, [#allocation4]
    $region45: #{tpu_custom_call.1} parent=1 // pred_fallthru
      _
    // Predicated region
    $region46: #{tpu_custom_call.1} parent=1 // pred_check
      _
    $region47: #{tpu_custom_call.1} parent=1 // pred_check_branch
      %3446 = sbr.rel (0) target = $region49
    $region48: #{tpu_custom_call.1} parent=1 // pred_region
      %3448 = dma.done [#allocation4], 1024
    $region49: #{tpu_custom_call.1} parent=1 // pred_fallthru
      _
    %3449 = vsyncpa [#allocation3], 1
    %3450 = vsyncpa [#allocation6], 1
    %3451 = vsyncpa [#allocation9], 1
    %3452 = vsyncpa [#allocation4], 1

</llo_original>
